<compile_context>
chip_gen: v7x
topology: tpu7x:2x2x1
jax: 0.10.0
libtpu: 0.0.40
codegen_flags: <defaults>
</compile_context>

<pallas_src>
import functools

import jax
import jax.numpy as jnp
from jax.experimental import pallas as pl
from jax.experimental.pallas import tpu as pltpu

FIRST_LAYER = 100
SECOND_LAYER = 50
OUTPUT_SIZE = 10
IMAGE_SIZE = 28 * 28
BN_EPS = 1e-5
PAD = 128  # lane-dense padded width for hidden / output feature dims


def _round_up(n, m):
    return (n + m - 1) // m * m


def _combine_batch_stats(stats_ref, mean_row, m2_row, h, valid, n_a, n_b):
    """Chan parallel-variance combine of one masked (TB, PAD) tile into the
    running (mean, M2) rows of stats_ref.  `h` must be 0 on invalid rows."""
    tile_sum = jnp.sum(h, axis=0, keepdims=True)
    tile_mean = tile_sum / n_b
    d = jnp.where(valid, h - tile_mean, 0.0)
    tile_m2 = jnp.sum(d * d, axis=0, keepdims=True)
    mean_a = stats_ref[mean_row:mean_row + 1, :]
    m2_a = stats_ref[m2_row:m2_row + 1, :]
    delta = tile_mean - mean_a
    n_ab = n_a + n_b
    stats_ref[mean_row:mean_row + 1, :] = mean_a + delta * (n_b / n_ab)
    stats_ref[m2_row:m2_row + 1, :] = (
        m2_a + tile_m2 + delta * delta * (n_a * n_b / n_ab))


def _normnet_kernel(batch, tile_b,
                    x_ref, w0_ref, w1_ref, w2_ref, vec_ref,   # inputs
                    out_ref,                                  # output
                    hstage_ref, stats_ref):                   # VMEM scratch
    """vec_ref rows: 0=b0 1=gamma1 2=beta1 3=b1 4=gamma2 5=beta2 6=b2 7=unused.
    stats_ref rows: 0=mean1 1=M2_1 2=mean2 3=M2_2 (f32, full-batch)."""
    p = pl.program_id(0)   # phase
    i = pl.program_id(1)   # batch tile
    inv_n = jnp.float32(1.0 / batch)

    off = pl.multiple_of(i * tile_b, tile_b)
    row = jax.lax.broadcasted_iota(jnp.int32, (tile_b, 1), 0) + i * tile_b
    valid = row < batch
    n_a = jnp.minimum(i * tile_b, batch).astype(jnp.float32)
    n_b = jnp.minimum((i + 1) * tile_b, batch).astype(jnp.float32) - n_a

    @pl.when(jnp.logical_and(p == 0, i == 0))
    def _init():
        stats_ref[...] = jnp.zeros_like(stats_ref)

    # ---- phase 0: fc0 per x tile; stage bf16 pre-BN1 activations; BN1 stats --
    @pl.when(p == 0)
    def _phase0():
        h = jnp.dot(x_ref[...].astype(jnp.bfloat16), w0_ref[...],
                    preferred_element_type=jnp.float32) + vec_ref[0:1, :]
        h = jnp.where(valid, h, 0.0)   # mask ragged / OOB rows (stats + staging)
        hstage_ref[pl.ds(off, tile_b), :] = h.astype(jnp.bfloat16)
        _combine_batch_stats(stats_ref, 0, 1, h, valid, n_a, n_b)

    # ---- phase 1: BN1 / ReLU / fc1 per chunk; restage bf16 pre-BN2; BN2 stats
    @pl.when(p == 1)
    def _phase1():
        h1 = hstage_ref[pl.ds(off, tile_b), :].astype(jnp.float32)
        mu1 = stats_ref[0:1, :]
        var1 = stats_ref[1:2, :] * inv_n            # biased (PyTorch training)
        a1 = jnp.maximum(
            (h1 - mu1) * jax.lax.rsqrt(var1 + BN_EPS) * vec_ref[1:2, :]
            + vec_ref[2:3, :], 0.0)
        h2 = jnp.dot(a1.astype(jnp.bfloat16), w1_ref[...],
                     preferred_element_type=jnp.float32) + vec_ref[3:4, :]
        h2 = jnp.where(valid, h2, 0.0)
        hstage_ref[pl.ds(off, tile_b), :] = h2.astype(jnp.bfloat16)  # in place
        _combine_batch_stats(stats_ref, 2, 3, h2, valid, n_a, n_b)

    # ---- phase 2: BN2 / ReLU / fc2 / log_softmax; stream (TB,128) out chunks -
    @pl.when(p == 2)
    def _phase2():
        h2 = hstage_ref[pl.ds(off, tile_b), :].astype(jnp.float32)
        mu2 = stats_ref[2:3, :]
        var2 = stats_ref[3:4, :] * inv_n
        a2 = jnp.maximum(
            (h2 - mu2) * jax.lax.rsqrt(var2 + BN_EPS) * vec_ref[4:5, :]
            + vec_ref[5:6, :], 0.0)
        logits = jnp.dot(a2.astype(jnp.bfloat16), w2_ref[...],
                         preferred_element_type=jnp.float32) + vec_ref[6:7, :]
        col = jax.lax.broadcasted_iota(jnp.int32, (1, PAD), 1)
        logits = jnp.where(col < OUTPUT_SIZE, logits, -1e30)
        m = jnp.max(logits, axis=1, keepdims=True)
        z = logits - m
        lse = jnp.log(jnp.sum(jnp.exp(z), axis=1, keepdims=True))
        out_ref[...] = z - lse                      # lane-dense (TB, 128) store


def normnet_forward(x, kparams, *, tile_b=512, vmem_limit_bytes=None):
    """x: (B, IMAGE_SIZE) float32 or bfloat16, unpadded.
    kparams: padded/packed params from init_params."""
    B = x.shape[0]
    assert x.shape[1] == IMAGE_SIZE

    # batch tile: multiple of 16 (bf16 sublane pack), no full-array pre-pad.
    TB = min(_round_up(tile_b, 16), max(16, (B // 16) * 16))
    nb = -(-B // TB)
    B_pad = nb * TB

    if vmem_limit_bytes is None:
        try:
            cap = pltpu.get_tpu_info().vmem_capacity_bytes
        except Exception:
            cap = 64 * 1024 * 1024          # conservative (v7x physical VMEM)
        vmem_limit_bytes = min(cap * 7 // 8, 112 * 1024 * 1024)

    est = (B_pad * PAD * 2                                   # bf16 staging
           + 2 * TB * IMAGE_SIZE * x.dtype.itemsize          # x double buffer
           + 2 * TB * PAD * 4                                # out double buffer
           + 2 * 2 * (IMAGE_SIZE * PAD + 2 * PAD * PAD)      # bf16 weights
           + 2 * 8 * PAD * 4 + 4 * PAD * 4)                  # vec + stats
    if est > vmem_limit_bytes:
        raise ValueError(
            f"estimated VMEM {est / 2**20:.1f} MiB exceeds limit "
            f"{vmem_limit_bytes / 2**20:.1f} MiB; reduce batch/tile_b or split "
            f"the batch across multiple calls")

    kernel = functools.partial(_normnet_kernel, B, TB)
    last = nb - 1

    grid_spec = pltpu.PrefetchScalarGridSpec(
        num_scalar_prefetch=0,
        grid=(3, nb),                                    # (phase, batch tile)
        in_specs=[
            # x: streamed only in phase 0; index frozen afterwards -> no re-DMA.
            pl.BlockSpec((TB, IMAGE_SIZE),
                         lambda p, i: (jnp.where(p == 0, i, last), 0)),
            pl.BlockSpec((IMAGE_SIZE, PAD), lambda p, i: (0, 0)),   # w0 resident
            pl.BlockSpec((PAD, PAD), lambda p, i: (0, 0)),          # w1 resident
            pl.BlockSpec((PAD, PAD), lambda p, i: (0, 0)),          # w2 resident
            pl.BlockSpec((8, PAD), lambda p, i: (0, 0)),            # packed vecs
        ],
        # out: written only in phase 2, streamed back per tile (not resident).
        out_specs=pl.BlockSpec((TB, PAD),
                               lambda p, i: (jnp.where(p == 2, i, 0), 0)),
        scratch_shapes=[
            pltpu.VMEM((B_pad, PAD), jnp.bfloat16),  # staged pre-BN activations
            pltpu.VMEM((4, PAD), jnp.float32),       # BN mean/M2 accumulators
        ],
    )

    out_full = pl.pallas_call(
        kernel,
        out_shape=jax.ShapeDtypeStruct((B, PAD), jnp.float32),
        grid_spec=grid_spec,
        compiler_params=pltpu.CompilerParams(
            # phase axis and batch axis both carry sequential BN dependencies.
            dimension_semantics=("arbitrary", "arbitrary"),
            vmem_limit_bytes=int(vmem_limit_bytes),
        ),
    )(x, kparams["w0"], kparams["w1"], kparams["w2"], kparams["vec"])

    # NOTE: padded lanes hold ~-1e30 log-probs; a fused consumer could take the
    # (B, 128) slab directly and skip this slice.
    return out_full[:, :OUTPUT_SIZE]


def init_params(key):
    """nn.Linear-style uniform(-1/sqrt(fan_in)) init; BN gamma=1, beta=0."""
    def linear(k, fan_in, fan_out):
        kw, kb = jax.random.split(k)
        bound = 1.0 / (fan_in ** 0.5)
        w = jax.random.uniform(kw, (fan_in, fan_out), jnp.float32, -bound, bound)
        b = jax.random.uniform(kb, (fan_out,), jnp.float32, -bound, bound)
        return w, b

    k0, k1, k2 = jax.random.split(key, 3)
    w0, b0 = linear(k0, IMAGE_SIZE, FIRST_LAYER)
    w1, b1 = linear(k1, FIRST_LAYER, SECOND_LAYER)
    w2, b2 = linear(k2, SECOND_LAYER, OUTPUT_SIZE)
    raw = dict(w0=w0, b0=b0, w1=w1, b1=b1, w2=w2, b2=b2)

    def pad2(a, rows, cols):
        return jnp.zeros((rows, cols), jnp.float32).at[:a.shape[0], :a.shape[1]].set(a)

    def pad1(v):
        return jnp.zeros((PAD,), jnp.float32).at[:v.shape[0]].set(v)

    # packed rows: b0, gamma1, beta1, b1, gamma2, beta2, b2, (pad to 8 sublanes)
    # gamma/beta are 0 in padded feature lanes so those lanes stay exactly 0.
    vec = jnp.stack([
        pad1(b0),
        pad1(jnp.ones((FIRST_LAYER,), jnp.float32)),
        jnp.zeros((PAD,), jnp.float32),
        pad1(b1),
        pad1(jnp.ones((SECOND_LAYER,), jnp.float32)),
        jnp.zeros((PAD,), jnp.float32),
        pad1(b2),
        jnp.zeros((PAD,), jnp.float32),
    ], axis=0)

    kparams = dict(
        w0=pad2(w0, IMAGE_SIZE, PAD).astype(jnp.bfloat16),
        w1=pad2(w1, PAD, PAD).astype(jnp.bfloat16),
        w2=pad2(w2, PAD, PAD).astype(jnp.bfloat16),
        vec=vec,
    )
    return kparams, raw


def normnet_reference(x, raw):
    """Pure-JAX reference mirroring the kernel numerics: bf16 matmul inputs,
    f32 accumulation/BN/softmax, bf16 staging of the pre-BN activations."""
    def mm(a, w):
        return jnp.dot(a.astype(jnp.bfloat16), w.astype(jnp.bfloat16),
                       preferred_element_type=jnp.float32)

    def bn(h):  # training-mode BatchNorm1d, gamma=1, beta=0, biased variance
        mu = jnp.mean(h, axis=0, keepdims=True)
        var = jnp.mean((h - mu) ** 2, axis=0, keepdims=True)
        hq = h.astype(jnp.bfloat16).astype(jnp.float32)  # kernel's bf16 staging
        return (hq - mu) * jax.lax.rsqrt(var + BN_EPS)

    h = jnp.maximum(bn(mm(x, raw["w0"]) + raw["b0"]), 0.0)
    h = jnp.maximum(bn(mm(h, raw["w1"]) + raw["b1"]), 0.0)
    logits = mm(h, raw["w2"]) + raw["b2"]
    return jax.nn.log_softmax(logits, axis=1)


if __name__ == "__main__":
    key = jax.random.PRNGKey(0)
    k_params, k_x = jax.random.split(key)
    kparams, raw = init_params(k_params)

    # small demo; tile_b=48 -> 3 batch tiles with a ragged last tile (4 valid
    # rows), exercising the 3-phase grid, partial blocks and row masking.
    batch = 100
    x = jax.random.normal(k_x, (batch, IMAGE_SIZE), jnp.float32)

    out = normnet_forward(x, kparams, tile_b=48)
    out = jax.block_until_ready(out)

    assert out.shape == (batch, OUTPUT_SIZE)
    # log_softmax rows must (approximately) exponentiate-sum to 1.
    row_sums = jnp.sum(jnp.exp(out), axis=1)
    assert bool(jnp.all(jnp.abs(row_sums - 1.0) < 1e-4))
    # match the pure-JAX reference (same bf16 matmul inputs / bf16 staging).
    ref = normnet_reference(x, raw)
    max_err = float(jnp.max(jnp.abs(out - ref)))
    assert max_err < 1e-2, f"max abs error vs reference: {max_err}"

    print("KERNEL_OK")
</pallas_src>

<mosaic_0001>
module attributes {stable_mosaic.version = 11 : i64} {
  func.func @_normnet_kernel(%arg0: i32, %arg1: i32, %arg2: memref<48x784xf32, #tpu.memory_space<vmem>>, %arg3: memref<784x128xbf16, #tpu.memory_space<vmem>>, %arg4: memref<128x128xbf16, #tpu.memory_space<vmem>>, %arg5: memref<128x128xbf16, #tpu.memory_space<vmem>>, %arg6: memref<8x128xf32, #tpu.memory_space<vmem>>, %arg7: memref<48x128xf32, #tpu.memory_space<vmem>>, %arg8: memref<144x128xbf16, #tpu.memory_space<vmem>>, %arg9: memref<4x128xf32, #tpu.memory_space<vmem>>) attributes {dimension_semantics = [#tpu.dimension_semantics<arbitrary>, #tpu.dimension_semantics<arbitrary>], iteration_bounds = array<i64: 3, 3>, scalar_prefetch = 0 : i64, scratch_operands = 2 : i64, tpu.core_type = #tpu.core_type<tc>, window_params = [{transform_indices = @transform_0, window_bounds = array<i64: 48, 784>}, {pipeline_mode = #tpu.pipeline_mode<synchronous>, transform_indices = @transform_1, window_bounds = array<i64: 784, 128>}, {pipeline_mode = #tpu.pipeline_mode<synchronous>, transform_indices = @transform_2, window_bounds = array<i64: 128, 128>}, {pipeline_mode = #tpu.pipeline_mode<synchronous>, transform_indices = @transform_3, window_bounds = array<i64: 128, 128>}, {pipeline_mode = #tpu.pipeline_mode<synchronous>, transform_indices = @transform_4, window_bounds = array<i64: 8, 128>}, {transform_indices = @transform_5, window_bounds = array<i64: 48, 128>}]} {
    %c48_i32 = arith.constant 48 : i32
    %0 = arith.muli %arg1, %c48_i32 : i32
    %1 = tpu.assume_multiple %0, 48 : i32
    %2 = tpu.iota {dimensions = array<i32: 0>} : vector<48x1xi32>
    %c48_i32_0 = arith.constant 48 : i32
    %3 = arith.muli %arg1, %c48_i32_0 : i32
    %4 = vector.broadcast %3 : i32 to vector<48x1xi32>
    %5 = arith.addi %2, %4 : vector<48x1xi32>
    %c100_i32 = arith.constant 100 : i32
    %6 = vector.broadcast %c100_i32 : i32 to vector<48x1xi32>
    %7 = arith.cmpi slt, %5, %6 : vector<48x1xi32>
    %c48_i32_1 = arith.constant 48 : i32
    %8 = arith.muli %arg1, %c48_i32_1 : i32
    %c100_i32_2 = arith.constant 100 : i32
    %9 = arith.minsi %8, %c100_i32_2 : i32
    %10 = arith.sitofp %9 : i32 to f32
    %c1_i32 = arith.constant 1 : i32
    %11 = arith.addi %arg1, %c1_i32 : i32
    %c48_i32_3 = arith.constant 48 : i32
    %12 = arith.muli %11, %c48_i32_3 : i32
    %c100_i32_4 = arith.constant 100 : i32
    %13 = arith.minsi %12, %c100_i32_4 : i32
    %14 = arith.sitofp %13 : i32 to f32
    %15 = arith.subf %14, %10 : f32
    %c0_i32 = arith.constant 0 : i32
    %16 = arith.cmpi eq, %arg0, %c0_i32 : i32
    %c0_i32_5 = arith.constant 0 : i32
    %17 = arith.cmpi eq, %arg1, %c0_i32_5 : i32
    %18 = arith.andi %16, %17 : i1
    %19 = arith.extui %18 : i1 to i32
    %c0_i32_6 = arith.constant 0 : i32
    %20 = arith.cmpi ne, %19, %c0_i32_6 : i32
    scf.if %20 {
      %cst_13 = arith.constant 0.000000e+00 : f32
      %30 = vector.broadcast %cst_13 : f32 to vector<4x128xf32>
      %c0 = arith.constant 0 : index
      %c0_14 = arith.constant 0 : index
      %31 = vector.load %arg9[%c0, %c0_14] : memref<4x128xf32, #tpu.memory_space<vmem>>, vector<4x128xf32>
      tpu.vector_store %arg9[%c0, %c0_14], %30 {strides = array<i32>} : memref<4x128xf32, #tpu.memory_space<vmem>>, vector<4x128xf32>,
    } else {
    }
    %c0_i32_7 = arith.constant 0 : i32
    %21 = arith.cmpi eq, %arg0, %c0_i32_7 : i32
    %22 = arith.extui %21 : i1 to i32
    %c0_i32_8 = arith.constant 0 : i32
    %23 = arith.cmpi ne, %22, %c0_i32_8 : i32
    scf.if %23 {
      %c0 = arith.constant 0 : index
      %c0_13 = arith.constant 0 : index
      %30 = vector.load %arg2[%c0, %c0_13] : memref<48x784xf32, #tpu.memory_space<vmem>>, vector<48x784xf32>
      %31 = arith.truncf %30 : vector<48x784xf32> to vector<48x784xbf16>
      %c0_14 = arith.constant 0 : index
      %c0_15 = arith.constant 0 : index
      %32 = vector.load %arg3[%c0_14, %c0_15] : memref<784x128xbf16, #tpu.memory_space<vmem>>, vector<784x128xbf16>
      %cst_16 = arith.constant dense<0.000000e+00> : vector<48x128xf32>
      %33 = tpu.matmul %31, %32, %cst_16 {dimension_numbers = #tpu.dot_dimension_numbers<[1], [0], [0], [1], [0, 0, 1, 1], [], []>} : vector<48x784xbf16>, vector<784x128xbf16>, vector<48x128xf32> -> vector<48x128xf32>
      %c0_17 = arith.constant 0 : index
      %c0_18 = arith.constant 0 : index
      %34 = vector.load %arg6[%c0_17, %c0_18] : memref<8x128xf32, #tpu.memory_space<vmem>>, vector<1x128xf32>
      %35 = vector.broadcast %34 : vector<1x128xf32> to vector<48x128xf32>
      %36 = arith.addf %33, %35 : vector<48x128xf32>
      %cst_19 = arith.constant 0.000000e+00 : f32
      %37 = vector.shape_cast %7 : vector<48x1xi1> to vector<48x1xi1>
      %38 = vector.broadcast %37 : vector<48x1xi1> to vector<48x128xi1>
      %39 = vector.broadcast %cst_19 : f32 to vector<48x128xf32>
      %40 = arith.select %38, %36, %39 : vector<48x128xi1>, vector<48x128xf32>
      %41 = arith.truncf %40 : vector<48x128xf32> to vector<48x128xbf16>
      %42 = arith.index_cast %1 : i32 to index
      %c0_20 = arith.constant 0 : index
      %43 = vector.load %arg8[%42, %c0_20] : memref<144x128xbf16, #tpu.memory_space<vmem>>, vector<48x128xbf16>
      tpu.vector_store %arg8[%42, %c0_20], %41 {strides = array<i32>} : memref<144x128xbf16, #tpu.memory_space<vmem>>, vector<48x128xbf16>,
      %cst_21 = arith.constant dense<0.000000e+00> : vector<128xf32>
      %44 = vector.multi_reduction <add>, %40, %cst_21 [0] : vector<48x128xf32> to vector<128xf32>
      %45 = vector.shape_cast %44 : vector<128xf32> to vector<1x128xf32>
      %46 = vector.broadcast %15 : f32 to vector<1x128xf32>
      %47 = arith.divf %45, %46 : vector<1x128xf32>
      %48 = vector.broadcast %47 : vector<1x128xf32> to vector<48x128xf32>
      %49 = arith.subf %40, %48 : vector<48x128xf32>
      %cst_22 = arith.constant 0.000000e+00 : f32
      %50 = vector.shape_cast %7 : vector<48x1xi1> to vector<48x1xi1>
      %51 = vector.broadcast %50 : vector<48x1xi1> to vector<48x128xi1>
      %52 = vector.broadcast %cst_22 : f32 to vector<48x128xf32>
      %53 = arith.select %51, %49, %52 : vector<48x128xi1>, vector<48x128xf32>
      %54 = arith.mulf %53, %53 : vector<48x128xf32>
      %cst_23 = arith.constant dense<0.000000e+00> : vector<128xf32>
      %55 = vector.multi_reduction <add>, %54, %cst_23 [0] : vector<48x128xf32> to vector<128xf32>
      %56 = vector.shape_cast %55 : vector<128xf32> to vector<1x128xf32>
      %c0_24 = arith.constant 0 : index
      %c0_25 = arith.constant 0 : index
      %57 = vector.load %arg9[%c0_24, %c0_25] : memref<4x128xf32, #tpu.memory_space<vmem>>, vector<1x128xf32>
      %c1 = arith.constant 1 : index
      %c0_26 = arith.constant 0 : index
      %58 = vector.load %arg9[%c1, %c0_26] : memref<4x128xf32, #tpu.memory_space<vmem>>, vector<1x128xf32>
      %59 = arith.subf %47, %57 : vector<1x128xf32>
      %60 = arith.addf %10, %15 : f32
      %61 = arith.divf %15, %60 : f32
      %62 = vector.broadcast %61 : f32 to vector<1x128xf32>
      %63 = arith.mulf %59, %62 : vector<1x128xf32>
      %64 = arith.addf %57, %63 : vector<1x128xf32>
      %c0_27 = arith.constant 0 : index
      %c0_28 = arith.constant 0 : index
      %65 = vector.load %arg9[%c0_27, %c0_28] : memref<4x128xf32, #tpu.memory_space<vmem>>, vector<1x128xf32>
      tpu.vector_store %arg9[%c0_27, %c0_28], %64 {strides = array<i32>} : memref<4x128xf32, #tpu.memory_space<vmem>>, vector<1x128xf32>,
      %66 = arith.addf %58, %56 : vector<1x128xf32>
      %67 = arith.mulf %59, %59 : vector<1x128xf32>
      %68 = arith.mulf %10, %15 : f32
      %69 = arith.divf %68, %60 : f32
      %70 = vector.broadcast %69 : f32 to vector<1x128xf32>
      %71 = arith.mulf %67, %70 : vector<1x128xf32>
      %72 = arith.addf %66, %71 : vector<1x128xf32>
      %c1_29 = arith.constant 1 : index
      %c0_30 = arith.constant 0 : index
      %73 = vector.load %arg9[%c1_29, %c0_30] : memref<4x128xf32, #tpu.memory_space<vmem>>, vector<1x128xf32>
      tpu.vector_store %arg9[%c1_29, %c0_30], %72 {strides = array<i32>} : memref<4x128xf32, #tpu.memory_space<vmem>>, vector<1x128xf32>,
    } else {
    }
    %c1_i32_9 = arith.constant 1 : i32
    %24 = arith.cmpi eq, %arg0, %c1_i32_9 : i32
    %25 = arith.extui %24 : i1 to i32
    %cst = arith.constant 0.00999999977 : f32
    %c0_i32_10 = arith.constant 0 : i32
    %26 = arith.cmpi ne, %25, %c0_i32_10 : i32
    scf.if %26 {
      %30 = arith.index_cast %1 : i32 to index
      %c0 = arith.constant 0 : index
      %31 = vector.load %arg8[%30, %c0] : memref<144x128xbf16, #tpu.memory_space<vmem>>, vector<48x128xbf16>
      %32 = arith.extf %31 : vector<48x128xbf16> to vector<48x128xf32>
      %c0_13 = arith.constant 0 : index
      %c0_14 = arith.constant 0 : index
      %33 = vector.load %arg9[%c0_13, %c0_14] : memref<4x128xf32, #tpu.memory_space<vmem>>, vector<1x128xf32>
      %c1 = arith.constant 1 : index
      %c0_15 = arith.constant 0 : index
      %34 = vector.load %arg9[%c1, %c0_15] : memref<4x128xf32, #tpu.memory_space<vmem>>, vector<1x128xf32>
      %35 = vector.broadcast %cst : f32 to vector<1x128xf32>
      %36 = arith.mulf %34, %35 : vector<1x128xf32>
      %37 = vector.broadcast %33 : vector<1x128xf32> to vector<48x128xf32>
      %38 = arith.subf %32, %37 : vector<48x128xf32>
      %cst_16 = arith.constant 9.99999974E-6 : f32
      %39 = vector.broadcast %cst_16 : f32 to vector<1x128xf32>
      %40 = arith.addf %36, %39 : vector<1x128xf32>
      %41 = math.rsqrt %40 : vector<1x128xf32>
      %42 = vector.broadcast %41 : vector<1x128xf32> to vector<48x128xf32>
      %43 = arith.mulf %38, %42 : vector<48x128xf32>
      %c1_17 = arith.constant 1 : index
      %c0_18 = arith.constant 0 : index
      %44 = vector.load %arg6[%c1_17, %c0_18] : memref<8x128xf32, #tpu.memory_space<vmem>>, vector<1x128xf32>
      %45 = vector.broadcast %44 : vector<1x128xf32> to vector<48x128xf32>
      %46 = arith.mulf %43, %45 : vector<48x128xf32>
      %c2 = arith.constant 2 : index
      %c0_19 = arith.constant 0 : index
      %47 = vector.load %arg6[%c2, %c0_19] : memref<8x128xf32, #tpu.memory_space<vmem>>, vector<1x128xf32>
      %48 = vector.broadcast %47 : vector<1x128xf32> to vector<48x128xf32>
      %49 = arith.addf %46, %48 : vector<48x128xf32>
      %cst_20 = arith.constant 0.000000e+00 : f32
      %50 = vector.broadcast %cst_20 : f32 to vector<48x128xf32>
      %51 = arith.maximumf %49, %50 : vector<48x128xf32>
      %52 = arith.truncf %51 : vector<48x128xf32> to vector<48x128xbf16>
      %c0_21 = arith.constant 0 : index
      %c0_22 = arith.constant 0 : index
      %53 = vector.load %arg4[%c0_21, %c0_22] : memref<128x128xbf16, #tpu.memory_space<vmem>>, vector<128x128xbf16>
      %cst_23 = arith.constant dense<0.000000e+00> : vector<48x128xf32>
      %54 = tpu.matmul %52, %53, %cst_23 {dimension_numbers = #tpu.dot_dimension_numbers<[1], [0], [0], [1], [0, 0, 1, 1], [], []>} : vector<48x128xbf16>, vector<128x128xbf16>, vector<48x128xf32> -> vector<48x128xf32>
      %c3 = arith.constant 3 : index
      %c0_24 = arith.constant 0 : index
      %55 = vector.load %arg6[%c3, %c0_24] : memref<8x128xf32, #tpu.memory_space<vmem>>, vector<1x128xf32>
      %56 = vector.broadcast %55 : vector<1x128xf32> to vector<48x128xf32>
      %57 = arith.addf %54, %56 : vector<48x128xf32>
      %cst_25 = arith.constant 0.000000e+00 : f32
      %58 = vector.shape_cast %7 : vector<48x1xi1> to vector<48x1xi1>
      %59 = vector.broadcast %58 : vector<48x1xi1> to vector<48x128xi1>
      %60 = vector.broadcast %cst_25 : f32 to vector<48x128xf32>
      %61 = arith.select %59, %57, %60 : vector<48x128xi1>, vector<48x128xf32>
      %62 = arith.truncf %61 : vector<48x128xf32> to vector<48x128xbf16>
      %63 = arith.index_cast %1 : i32 to index
      %c0_26 = arith.constant 0 : index
      %64 = vector.load %arg8[%63, %c0_26] : memref<144x128xbf16, #tpu.memory_space<vmem>>, vector<48x128xbf16>
      tpu.vector_store %arg8[%63, %c0_26], %62 {strides = array<i32>} : memref<144x128xbf16, #tpu.memory_space<vmem>>, vector<48x128xbf16>,
      %cst_27 = arith.constant dense<0.000000e+00> : vector<128xf32>
      %65 = vector.multi_reduction <add>, %61, %cst_27 [0] : vector<48x128xf32> to vector<128xf32>
      %66 = vector.shape_cast %65 : vector<128xf32> to vector<1x128xf32>
      %67 = vector.broadcast %15 : f32 to vector<1x128xf32>
      %68 = arith.divf %66, %67 : vector<1x128xf32>
      %69 = vector.broadcast %68 : vector<1x128xf32> to vector<48x128xf32>
      %70 = arith.subf %61, %69 : vector<48x128xf32>
      %cst_28 = arith.constant 0.000000e+00 : f32
      %71 = vector.shape_cast %7 : vector<48x1xi1> to vector<48x1xi1>
      %72 = vector.broadcast %71 : vector<48x1xi1> to vector<48x128xi1>
      %73 = vector.broadcast %cst_28 : f32 to vector<48x128xf32>
      %74 = arith.select %72, %70, %73 : vector<48x128xi1>, vector<48x128xf32>
      %75 = arith.mulf %74, %74 : vector<48x128xf32>
      %cst_29 = arith.constant dense<0.000000e+00> : vector<128xf32>
      %76 = vector.multi_reduction <add>, %75, %cst_29 [0] : vector<48x128xf32> to vector<128xf32>
      %77 = vector.shape_cast %76 : vector<128xf32> to vector<1x128xf32>
      %c2_30 = arith.constant 2 : index
      %c0_31 = arith.constant 0 : index
      %78 = vector.load %arg9[%c2_30, %c0_31] : memref<4x128xf32, #tpu.memory_space<vmem>>, vector<1x128xf32>
      %c3_32 = arith.constant 3 : index
      %c0_33 = arith.constant 0 : index
      %79 = vector.load %arg9[%c3_32, %c0_33] : memref<4x128xf32, #tpu.memory_space<vmem>>, vector<1x128xf32>
      %80 = arith.subf %68, %78 : vector<1x128xf32>
      %81 = arith.addf %10, %15 : f32
      %82 = arith.divf %15, %81 : f32
      %83 = vector.broadcast %82 : f32 to vector<1x128xf32>
      %84 = arith.mulf %80, %83 : vector<1x128xf32>
      %85 = arith.addf %78, %84 : vector<1x128xf32>
      %c2_34 = arith.constant 2 : index
      %c0_35 = arith.constant 0 : index
      %86 = vector.load %arg9[%c2_34, %c0_35] : memref<4x128xf32, #tpu.memory_space<vmem>>, vector<1x128xf32>
      tpu.vector_store %arg9[%c2_34, %c0_35], %85 {strides = array<i32>} : memref<4x128xf32, #tpu.memory_space<vmem>>, vector<1x128xf32>,
      %87 = arith.addf %79, %77 : vector<1x128xf32>
      %88 = arith.mulf %80, %80 : vector<1x128xf32>
      %89 = arith.mulf %10, %15 : f32
      %90 = arith.divf %89, %81 : f32
      %91 = vector.broadcast %90 : f32 to vector<1x128xf32>
      %92 = arith.mulf %88, %91 : vector<1x128xf32>
      %93 = arith.addf %87, %92 : vector<1x128xf32>
      %c3_36 = arith.constant 3 : index
      %c0_37 = arith.constant 0 : index
      %94 = vector.load %arg9[%c3_36, %c0_37] : memref<4x128xf32, #tpu.memory_space<vmem>>, vector<1x128xf32>
      tpu.vector_store %arg9[%c3_36, %c0_37], %93 {strides = array<i32>} : memref<4x128xf32, #tpu.memory_space<vmem>>, vector<1x128xf32>,
    } else {
    }
    %c2_i32 = arith.constant 2 : i32
    %27 = arith.cmpi eq, %arg0, %c2_i32 : i32
    %28 = arith.extui %27 : i1 to i32
    %cst_11 = arith.constant 0.00999999977 : f32
    %c0_i32_12 = arith.constant 0 : i32
    %29 = arith.cmpi ne, %28, %c0_i32_12 : i32
    scf.if %29 {
      %30 = arith.index_cast %1 : i32 to index
      %c0 = arith.constant 0 : index
      %31 = vector.load %arg8[%30, %c0] : memref<144x128xbf16, #tpu.memory_space<vmem>>, vector<48x128xbf16>
      %32 = arith.extf %31 : vector<48x128xbf16> to vector<48x128xf32>
      %c2 = arith.constant 2 : index
      %c0_13 = arith.constant 0 : index
      %33 = vector.load %arg9[%c2, %c0_13] : memref<4x128xf32, #tpu.memory_space<vmem>>, vector<1x128xf32>
      %c3 = arith.constant 3 : index
      %c0_14 = arith.constant 0 : index
      %34 = vector.load %arg9[%c3, %c0_14] : memref<4x128xf32, #tpu.memory_space<vmem>>, vector<1x128xf32>
      %35 = vector.broadcast %cst_11 : f32 to vector<1x128xf32>
      %36 = arith.mulf %34, %35 : vector<1x128xf32>
      %37 = vector.broadcast %33 : vector<1x128xf32> to vector<48x128xf32>
      %38 = arith.subf %32, %37 : vector<48x128xf32>
      %cst_15 = arith.constant 9.99999974E-6 : f32
      %39 = vector.broadcast %cst_15 : f32 to vector<1x128xf32>
      %40 = arith.addf %36, %39 : vector<1x128xf32>
      %41 = math.rsqrt %40 : vector<1x128xf32>
      %42 = vector.broadcast %41 : vector<1x128xf32> to vector<48x128xf32>
      %43 = arith.mulf %38, %42 : vector<48x128xf32>
      %c4 = arith.constant 4 : index
      %c0_16 = arith.constant 0 : index
      %44 = vector.load %arg6[%c4, %c0_16] : memref<8x128xf32, #tpu.memory_space<vmem>>, vector<1x128xf32>
      %45 = vector.broadcast %44 : vector<1x128xf32> to vector<48x128xf32>
      %46 = arith.mulf %43, %45 : vector<48x128xf32>
      %c5 = arith.constant 5 : index
      %c0_17 = arith.constant 0 : index
      %47 = vector.load %arg6[%c5, %c0_17] : memref<8x128xf32, #tpu.memory_space<vmem>>, vector<1x128xf32>
      %48 = vector.broadcast %47 : vector<1x128xf32> to vector<48x128xf32>
      %49 = arith.addf %46, %48 : vector<48x128xf32>
      %cst_18 = arith.constant 0.000000e+00 : f32
      %50 = vector.broadcast %cst_18 : f32 to vector<48x128xf32>
      %51 = arith.maximumf %49, %50 : vector<48x128xf32>
      %52 = arith.truncf %51 : vector<48x128xf32> to vector<48x128xbf16>
      %c0_19 = arith.constant 0 : index
      %c0_20 = arith.constant 0 : index
      %53 = vector.load %arg5[%c0_19, %c0_20] : memref<128x128xbf16, #tpu.memory_space<vmem>>, vector<128x128xbf16>
      %cst_21 = arith.constant dense<0.000000e+00> : vector<48x128xf32>
      %54 = tpu.matmul %52, %53, %cst_21 {dimension_numbers = #tpu.dot_dimension_numbers<[1], [0], [0], [1], [0, 0, 1, 1], [], []>} : vector<48x128xbf16>, vector<128x128xbf16>, vector<48x128xf32> -> vector<48x128xf32>
      %c6 = arith.constant 6 : index
      %c0_22 = arith.constant 0 : index
      %55 = vector.load %arg6[%c6, %c0_22] : memref<8x128xf32, #tpu.memory_space<vmem>>, vector<1x128xf32>
      %56 = vector.broadcast %55 : vector<1x128xf32> to vector<48x128xf32>
      %57 = arith.addf %54, %56 : vector<48x128xf32>
      %58 = tpu.iota {dimensions = array<i32: 1>} : vector<1x128xi32>
      %c10_i32 = arith.constant 10 : i32
      %59 = vector.broadcast %c10_i32 : i32 to vector<1x128xi32>
      %60 = arith.cmpi slt, %58, %59 : vector<1x128xi32>
      %cst_23 = arith.constant -1.000000e+30 : f32
      %61 = vector.shape_cast %60 : vector<1x128xi1> to vector<1x128xi1>
      %62 = vector.broadcast %61 : vector<1x128xi1> to vector<48x128xi1>
      %63 = vector.broadcast %cst_23 : f32 to vector<48x128xf32>
      %64 = arith.select %62, %57, %63 : vector<48x128xi1>, vector<48x128xf32>
      %cst_24 = arith.constant dense<0xFF800000> : vector<48xf32>
      %65 = vector.multi_reduction <maximumf>, %64, %cst_24 [1] : vector<48x128xf32> to vector<48xf32>
      %66 = vector.shape_cast %65 : vector<48xf32> to vector<48x1xf32>
      %67 = vector.broadcast %66 : vector<48x1xf32> to vector<48x128xf32>
      %68 = arith.subf %64, %67 : vector<48x128xf32>
      %69 = math.exp %68 : vector<48x128xf32>
      %cst_25 = arith.constant dense<0.000000e+00> : vector<48xf32>
      %70 = vector.multi_reduction <add>, %69, %cst_25 [1] : vector<48x128xf32> to vector<48xf32>
      %71 = vector.shape_cast %70 : vector<48xf32> to vector<48x1xf32>
      %72 = math.log %71 : vector<48x1xf32>
      %73 = vector.broadcast %72 : vector<48x1xf32> to vector<48x128xf32>
      %74 = arith.subf %68, %73 : vector<48x128xf32>
      %c0_26 = arith.constant 0 : index
      %c0_27 = arith.constant 0 : index
      %75 = vector.load %arg7[%c0_26, %c0_27] : memref<48x128xf32, #tpu.memory_space<vmem>>, vector<48x128xf32>
      tpu.vector_store %arg7[%c0_26, %c0_27], %74 {strides = array<i32>} : memref<48x128xf32, #tpu.memory_space<vmem>>, vector<48x128xf32>,
    } else {
    }
    return
  }
  func.func @transform_0(%arg0: i32, %arg1: i32) -> (i32, i32) {
    %c0_i32 = arith.constant 0 : i32
    %0 = arith.cmpi eq, %arg0, %c0_i32 : i32
    %c2_i32 = arith.constant 2 : i32
    %1 = arith.select %0, %arg1, %c2_i32 : i32
    %c0_i32_0 = arith.constant 0 : i32
    %c0_i32_1 = arith.constant 0 : i32
    return %1, %c0_i32_0 : i32, i32
  }
  func.func @transform_1(%arg0: i32, %arg1: i32) -> (i32, i32) {
    %c0_i32 = arith.constant 0 : i32
    %c0_i32_0 = arith.constant 0 : i32
    %c0_i32_1 = arith.constant 0 : i32
    return %c0_i32, %c0_i32_0 : i32, i32
  }
  func.func @transform_2(%arg0: i32, %arg1: i32) -> (i32, i32) {
    %c0_i32 = arith.constant 0 : i32
    %c0_i32_0 = arith.constant 0 : i32
    %c0_i32_1 = arith.constant 0 : i32
    return %c0_i32, %c0_i32_0 : i32, i32
  }
  func.func @transform_3(%arg0: i32, %arg1: i32) -> (i32, i32) {
    %c0_i32 = arith.constant 0 : i32
    %c0_i32_0 = arith.constant 0 : i32
    %c0_i32_1 = arith.constant 0 : i32
    return %c0_i32, %c0_i32_0 : i32, i32
  }
  func.func @transform_4(%arg0: i32, %arg1: i32) -> (i32, i32) {
    %c0_i32 = arith.constant 0 : i32
    %c0_i32_0 = arith.constant 0 : i32
    %c0_i32_1 = arith.constant 0 : i32
    return %c0_i32, %c0_i32_0 : i32, i32
  }
  func.func @transform_5(%arg0: i32, %arg1: i32) -> (i32, i32) {
    %c2_i32 = arith.constant 2 : i32
    %0 = arith.cmpi eq, %arg0, %c2_i32 : i32
    %c0_i32 = arith.constant 0 : i32
    %1 = arith.select %0, %arg1, %c0_i32 : i32
    %c0_i32_0 = arith.constant 0 : i32
    %c0_i32_1 = arith.constant 0 : i32
    return %1, %c0_i32_0 : i32, i32
  }
}

</mosaic_0001>

<llo_original>
// kernel: tpu_custom_call.1
$region0: #{tpu_custom_call.1}
  #allocation0 [shape = 'u32[]', space=smem, size = 0x4, offset = 0x4, fixed_abs, tag = 'smem constant byte address 0x4 - core index']
  #allocation1 [shape = 'u32[144,128]{1,0:T(1,128)}', space=vmem, size = 0x12000, scoped, tag = 'internal scratch']
  #allocation2 [shape = 'bf16[144,128]{1,0:T(16,128)(2,1)}', space=vmem, size = 0x9000, scoped, tag = 'scratch operand']
  #allocation3 [shape = 'f32[4,128]{1,0:T(4,128)}', space=vmem, size = 0x800, scoped, tag = 'scratch operand']
  %s0 = inlined_call_operand.hbm [shape: f32[100,784], index: 0, kind: input, shape index: {}]
  %s1 = inlined_call_operand.hbm [shape: bf16[784,128], index: 1, kind: input, shape index: {}]
  %s2 = inlined_call_operand.hbm [shape: bf16[128,128], index: 2, kind: input, shape index: {}]
  %s3 = inlined_call_operand.hbm [shape: bf16[128,128], index: 3, kind: input, shape index: {}]
  %s4 = inlined_call_operand.vmem [shape: f32[8,128], index: 4, kind: input, shape index: {}]
  %s5 = inlined_call_operand.hbm [shape: f32[100,128], index: 5, kind: output, shape index: {}]
  %s6 = sld [smem:[#allocation0]]
  $region85: #{tpu_custom_call.1} parent=0
    _
  %s8 = ssub.s32 1, %s6
  %s9 = scalar_select 0, %s8, %s6
  $region1: #{tpu_custom_call.1} parent=0
    #allocation4 [shape = 'u8[344064]{0}', space=vmem, size = 0x54000, scoped, tag = 'input window, operand 0']
    #allocation5 [shape = 's32[2]{0}', space=sflag, size = 0x8, scoped, tag = 'scoped memory for tpu_custom_call.1']
    #allocation6 [shape = 's32[2]{0}', space=sflag, size = 0x8, scoped, tag = 'scoped memory for tpu_custom_call.1']
    #allocation7 [shape = 'u8[200704]{0}', space=vmem, size = 0x31000, scoped, tag = 'input window, operand 1, single buffered']
    #allocation8 [shape = 's32[1]{0}', space=sflag, size = 0x4, scoped, tag = 'scoped memory for tpu_custom_call.1']
    #allocation9 [shape = 'u8[32768]{0}', space=vmem, size = 0x8000, scoped, tag = 'input window, operand 2, single buffered']
    #allocation10 [shape = 'u8[32768]{0}', space=vmem, size = 0x8000, scoped, tag = 'input window, operand 3, single buffered']
    #allocation11 [shape = 's32[1]{0}', space=sflag, size = 0x4, scoped, tag = 'scoped memory for tpu_custom_call.1']
    #allocation12 [shape = 'u8[49152]{0}', space=vmem, size = 0xc000, scoped, tag = 'output window, operand 0']
    %10 = vsyncpa [#allocation5], 0
    %s11 = scalar_lea.sflag [#allocation5], 1
    %12 = vsyncpa %s11, 0
    %13 = vsyncpa [#allocation8], 0
    %14 = vsyncpa [#allocation11], 0
    %15 = vsyncpa [#allocation6], 0
    %s16 = scalar_lea.sflag [#allocation6], 1
    %17 = vsyncpa %s16, 0
    loop: start=0, step=1, limit=11
    $region2: #{tpu_custom_call.1} parent=1 // loop_pre_header
      _
    $region3: #{tpu_custom_call.1} parent=1 // loop_header
      %s19 = sphi 0, %s23
      %p20 = scmp.ge.s32.totalorder %s19, 11
      %s26 = sphi 0, %s38
      %s27 = sphi 0, %s34
      %s28 = sphi 0, %s26
      %s29 = sphi 0, %s27
      %s30 = sphi 0, %s28
      %s31 = sphi 0, %s29
      %s45 = sphi 0, %s47
      %s48 = sphi 0, %s45
      %s49 = sphi 0, %s48
      %s65 = sphi 0, %s49
      %s69 = sphi 0, %s69
      %s71 = sphi 0, %s69
      %s72 = sphi 0, %s71
      %s86 = sphi 0, %s72
      %s90 = sphi 0, %s90
      %s92 = sphi 0, %s90
      %s93 = sphi 0, %s92
      %s107 = sphi 0, %s93
      %s111 = sphi 0, %s111
      %s113 = sphi 0, %s111
      %s114 = sphi 0, %s113
      %s128 = sphi 0, %s114
      %s132 = sphi 0, %s132
      %s134 = sphi 0, %s132
      %s135 = sphi 0, %s134
      %s149 = sphi 0, %s135
      %s159 = sphi 0, %s161
      %s162 = sphi 0, %s159
      %s163 = sphi 0, %s162
      %s179 = sphi 0, %s163
    $region4: #{tpu_custom_call.1} parent=1 // loop_header_branch
      %22 = sbr.rel (%p20) target = $region8
    $region5: #{tpu_custom_call.1} parent=1 // loop_body
      %s24 = ssub.s32 %s19, 1
      %s25 = ssub.s32 %s19, 2
      %s32 = sadd.s32 1, %s27
      %p33 = scmp.ge.s32.totalorder %s32, 3
      %s34 = scalar_select %p33, 0, %s32
      %s35 = sadd.s32 1, %s26
      %s36 = scalar_select %p33, %s35, %s26
      %p37 = scmp.ge.s32.totalorder %s36, 3
      %s38 = scalar_select %p37, 0, %s36
      %p39 = scmp.eq.s32.totalorder %s26, 0
      %s40 = scalar_select %p39, %s27, 2
      %p41 = scmp.eq.s32.totalorder %s38, 0
      %s42 = scalar_select %p41, %s34, 2
      %s43 = ssub.s32 %s40, %s42
      %p44 = scmp.eq.s32.totalorder %s43, 0
      %s46 = sadd.s32 %s45, 1
      %s47 = scalar_select %p44, %s45, %s46
      %p50 = pneg %p44
      %p51 = scmp.eq.s32.totalorder %s19, 8
      %p52 = por %p50, %p51
      %p53 = scmp.ne.s32.totalorder %s45, %s48
      %p54 = scmp.eq.s32.totalorder %s19, 0
      %p55 = por %p53, %p54
      %p56 = scmp.ne.s32.totalorder %s45, %s48
      %p57 = scmp.eq.s32.totalorder %s24, 8
      %p58 = por %p56, %p57
      %p59 = scmp.ne.s32.totalorder %s48, %s49
      %p60 = scmp.eq.s32.totalorder %s24, 0
      %p61 = por %p59, %p60
      %p62 = scmp.ne.s32.totalorder %s48, %s49
      %p63 = scmp.eq.s32.totalorder %s25, 8
      %p64 = por %p62, %p63
      %p66 = scmp.ne.s32.totalorder %s49, %s65
      %p67 = scmp.eq.s32.totalorder %s25, 0
      %p68 = por %p66, %p67
      %s70 = sadd.s32 %s69, 1
      %p73 = scmp.eq.s32.totalorder %s19, 8
      %p74 = scmp.ne.s32.totalorder %s69, %s71
      %p75 = scmp.eq.s32.totalorder %s19, 0
      %p76 = por %p74, %p75
      %p77 = scmp.ne.s32.totalorder %s69, %s71
      %p78 = scmp.eq.s32.totalorder %s24, 8
      %p79 = por %p77, %p78
      %p80 = scmp.ne.s32.totalorder %s71, %s72
      %p81 = scmp.eq.s32.totalorder %s24, 0
      %p82 = por %p80, %p81
      %p83 = scmp.ne.s32.totalorder %s71, %s72
      %p84 = scmp.eq.s32.totalorder %s25, 8
      %p85 = por %p83, %p84
      %p87 = scmp.ne.s32.totalorder %s72, %s86
      %p88 = scmp.eq.s32.totalorder %s25, 0
      %p89 = por %p87, %p88
      %s91 = sadd.s32 %s90, 1
      %p94 = scmp.eq.s32.totalorder %s19, 8
      %p95 = scmp.ne.s32.totalorder %s90, %s92
      %p96 = scmp.eq.s32.totalorder %s19, 0
      %p97 = por %p95, %p96
      %p98 = scmp.ne.s32.totalorder %s90, %s92
      %p99 = scmp.eq.s32.totalorder %s24, 8
      %p100 = por %p98, %p99
      %p101 = scmp.ne.s32.totalorder %s92, %s93
      %p102 = scmp.eq.s32.totalorder %s24, 0
      %p103 = por %p101, %p102
      %p104 = scmp.ne.s32.totalorder %s92, %s93
      %p105 = scmp.eq.s32.totalorder %s25, 8
      %p106 = por %p104, %p105
      %p108 = scmp.ne.s32.totalorder %s93, %s107
      %p109 = scmp.eq.s32.totalorder %s25, 0
      %p110 = por %p108, %p109
      %s112 = sadd.s32 %s111, 1
      %p115 = scmp.eq.s32.totalorder %s19, 8
      %p116 = scmp.ne.s32.totalorder %s111, %s113
      %p117 = scmp.eq.s32.totalorder %s19, 0
      %p118 = por %p116, %p117
      %p119 = scmp.ne.s32.totalorder %s111, %s113
      %p120 = scmp.eq.s32.totalorder %s24, 8
      %p121 = por %p119, %p120
      %p122 = scmp.ne.s32.totalorder %s113, %s114
      %p123 = scmp.eq.s32.totalorder %s24, 0
      %p124 = por %p122, %p123
      %p125 = scmp.ne.s32.totalorder %s113, %s114
      %p126 = scmp.eq.s32.totalorder %s25, 8
      %p127 = por %p125, %p126
      %p129 = scmp.ne.s32.totalorder %s114, %s128
      %p130 = scmp.eq.s32.totalorder %s25, 0
      %p131 = por %p129, %p130
      %s133 = sadd.s32 %s132, 1
      %p136 = scmp.eq.s32.totalorder %s19, 8
      %p137 = scmp.ne.s32.totalorder %s132, %s134
      %p138 = scmp.eq.s32.totalorder %s19, 0
      %p139 = por %p137, %p138
      %p140 = scmp.ne.s32.totalorder %s132, %s134
      %p141 = scmp.eq.s32.totalorder %s24, 8
      %p142 = por %p140, %p141
      %p143 = scmp.ne.s32.totalorder %s134, %s135
      %p144 = scmp.eq.s32.totalorder %s24, 0
      %p145 = por %p143, %p144
      %p146 = scmp.ne.s32.totalorder %s134, %s135
      %p147 = scmp.eq.s32.totalorder %s25, 8
      %p148 = por %p146, %p147
      %p150 = scmp.ne.s32.totalorder %s135, %s149
      %p151 = scmp.eq.s32.totalorder %s25, 0
      %p152 = por %p150, %p151
      %p153 = scmp.eq.s32.totalorder %s26, 2
      %s154 = scalar_select %p153, %s27, 0
      %p155 = scmp.eq.s32.totalorder %s38, 2
      %s156 = scalar_select %p155, %s34, 0
      %s157 = ssub.s32 %s154, %s156
      %p158 = scmp.eq.s32.totalorder %s157, 0
      %s160 = sadd.s32 %s159, 1
      %s161 = scalar_select %p158, %s159, %s160
      %p164 = pneg %p158
      %p165 = scmp.eq.s32.totalorder %s19, 8
      %p166 = por %p164, %p165
      %p167 = scmp.ne.s32.totalorder %s159, %s162
      %p168 = scmp.eq.s32.totalorder %s19, 0
      %p169 = por %p167, %p168
      %p170 = scmp.ne.s32.totalorder %s159, %s162
      %p171 = scmp.eq.s32.totalorder %s24, 8
      %p172 = por %p170, %p171
      %p173 = scmp.ne.s32.totalorder %s162, %s163
      %p174 = scmp.eq.s32.totalorder %s24, 0
      %p175 = por %p173, %p174
      %p176 = scmp.ne.s32.totalorder %s162, %s163
      %p177 = scmp.eq.s32.totalorder %s25, 8
      %p178 = por %p176, %p177
      %p180 = scmp.ne.s32.totalorder %s163, %s179
      %p181 = scmp.eq.s32.totalorder %s25, 0
      %p182 = por %p180, %p181
      %p183 = scmp.le.s32.totalorder 1, %s19
      %p184 = scmp.lt.s32.totalorder %s19, 10
      %p185 = pnand %p183, %p184
      %p186 = pneg %p185
      // Predicated region
      $region9: #{tpu_custom_call.1} parent=5 // pred_check
        _
      $region10: #{tpu_custom_call.1} parent=5 // pred_check_branch
        %188 = sbr.rel (%p185) target = $region12
      $region11: #{tpu_custom_call.1} parent=5 // pred_region
        %s189 = ssub.s32 %s19, 1
        // Predicated region
        $region13: #{tpu_custom_call.1} parent=11 // pred_check
          %p190 = pneg %p82
        $region14: #{tpu_custom_call.1} parent=11 // pred_check_branch
          %192 = sbr.rel (%p190) target = $region16
        $region15: #{tpu_custom_call.1} parent=11 // pred_region
          %s194 = ssub.s32 6272, 6272
          %195 = vsyncadd [#allocation8], %s194
          %s196 = sshll.u32 [#allocation7], 4
          %s197 = int_to_ptr.vmem [resolvable:$true] %s196
          %202 = dma.hbm_to_vmem [thread:$0]  %s1, 6272, %s197, [#allocation8], 64, 64, 4
        $region16: #{tpu_custom_call.1} parent=11 // pred_fallthru
          _
        // Predicated region
        $region17: #{tpu_custom_call.1} parent=11 // pred_check
          %p203 = pneg %p103
        $region18: #{tpu_custom_call.1} parent=11 // pred_check_branch
          %205 = sbr.rel (%p203) target = $region20
        $region19: #{tpu_custom_call.1} parent=11 // pred_region
          %s207 = ssub.s32 1024, 1024
          %208 = vsyncadd [#allocation8], %s207
          %s209 = sshll.u32 [#allocation9], 4
          %s210 = int_to_ptr.vmem [resolvable:$true] %s209
          %215 = dma.hbm_to_vmem [thread:$0]  %s2, 1024, %s210, [#allocation8], 64, 64, 4
        $region20: #{tpu_custom_call.1} parent=11 // pred_fallthru
          _
        // Predicated region
        $region21: #{tpu_custom_call.1} parent=11 // pred_check
          %p216 = pneg %p124
        $region22: #{tpu_custom_call.1} parent=11 // pred_check_branch
          %218 = sbr.rel (%p216) target = $region24
        $region23: #{tpu_custom_call.1} parent=11 // pred_region
          %s220 = ssub.s32 1024, 1024
          %221 = vsyncadd [#allocation11], %s220
          %s222 = sshll.u32 [#allocation10], 4
          %s223 = int_to_ptr.vmem [resolvable:$true] %s222
          %228 = dma.hbm_to_vmem [thread:$0]  %s3, 1024, %s223, [#allocation11], 64, 64, 4
        $region24: #{tpu_custom_call.1} parent=11 // pred_fallthru
          _
        // Predicated region
        $region25: #{tpu_custom_call.1} parent=11 // pred_check
          %p229 = pneg %p145
        $region26: #{tpu_custom_call.1} parent=11 // pred_check_branch
          %231 = sbr.rel (%p229) target = $region28
        $region27: #{tpu_custom_call.1} parent=11 // pred_region
          _
        $region28: #{tpu_custom_call.1} parent=11 // pred_fallthru
          _
      $region12: #{tpu_custom_call.1} parent=5 // pred_fallthru
        _
      %p232 = scmp.lt.s32.totalorder %s19, 9
      // Predicated region
      $region29: #{tpu_custom_call.1} parent=5 // pred_check
        %p233 = pneg %p232
      $region30: #{tpu_custom_call.1} parent=5 // pred_check_branch
        %235 = sbr.rel (%p233) target = $region32
      $region31: #{tpu_custom_call.1} parent=5 // pred_region
        // Predicated region
        $region33: #{tpu_custom_call.1} parent=31 // pred_check
          %p236 = pneg %p55
        $region34: #{tpu_custom_call.1} parent=31 // pred_check_branch
          %238 = sbr.rel (%p236) target = $region36
        $region35: #{tpu_custom_call.1} parent=31 // pred_region
          %s239 = sand.u32 %s45, 1
          %s240 = scalar_lea.sflag [#allocation5], %s239
          %s241 = sand.u32 %s45, 1
          %s242 = smul.addr %s241, 336
          %s243 = scalar_lea.vmem [#allocation4], %s242
          %p244 = scmp.eq.s32.totalorder %s26, 0
          %s245 = scalar_select %p244, %s27, 2
          %s246 = smul.u32 6, %s245
          %s247 = ssub.s32 13, %s246
          %p248 = scmp.lt.s32.totalorder %s247, 6
          %s249 = scalar_select %p248, %s247, 6
          %s250 = smul.u32 128, %s249
          %s251 = smul.u32 %s250, 7
          %s253 = ssub.s32 5376, %s251
          %254 = vsyncadd %s240, %s253
          %p255 = scmp.ne.s32.totalorder 0, %s251
          %s256 = smul.addr %s246, 7
          %s257 = smul.addr %s256, 128
          %s258 = scalar_lea.hbm %s0, %s257
          %s259 = smul.u32 56, %s249
          %s260 = sshll.u32 %s243, 4
          %s261 = int_to_ptr.vmem [resolvable:$true] %s260
          %s262 = sshll.u32 %s259, 4
          %266 = dma.hbm_to_vmem [thread:$0]  (%p255), %s258, %s262, %s261, %s240, 896, 896, 56
        $region36: #{tpu_custom_call.1} parent=31 // pred_fallthru
          _
      $region32: #{tpu_custom_call.1} parent=5 // pred_fallthru
        _
      %p267 = scmp.le.s32.totalorder 1, %s19
      %p268 = scmp.lt.s32.totalorder %s19, 10
      %p269 = pnand %p267, %p268
      %p270 = pneg %p269
      // Predicated region
      $region37: #{tpu_custom_call.1} parent=5 // pred_check
        _
      $region38: #{tpu_custom_call.1} parent=5 // pred_check_branch
        %272 = sbr.rel (%p269) target = $region40
      $region39: #{tpu_custom_call.1} parent=5 // pred_region
        %s273 = ssub.s32 %s19, 1
        %s274 = sand.u32 %s48, 1
        %s275 = scalar_lea.sflag [#allocation5], %s274
        %s276 = sand.u32 %s48, 1
        %s277 = smul.addr %s276, 336
        %s278 = scalar_lea.vmem [#allocation4], %s277
        // Predicated region
        $region41: #{tpu_custom_call.1} parent=39 // pred_check
          %p279 = pneg %p61
        $region42: #{tpu_custom_call.1} parent=39 // pred_check_branch
          %281 = sbr.rel (%p279) target = $region44
        $region43: #{tpu_custom_call.1} parent=39 // pred_region
          %282 = dma.done %s275, 5376
        $region44: #{tpu_custom_call.1} parent=39 // pred_fallthru
          _
        // Predicated region
        $region45: #{tpu_custom_call.1} parent=39 // pred_check
          %p283 = pneg %p82
        $region46: #{tpu_custom_call.1} parent=39 // pred_check_branch
          %285 = sbr.rel (%p283) target = $region48
        $region47: #{tpu_custom_call.1} parent=39 // pred_region
          %286 = dma.done [#allocation8], 6272
        $region48: #{tpu_custom_call.1} parent=39 // pred_fallthru
          _
        // Predicated region
        $region49: #{tpu_custom_call.1} parent=39 // pred_check
          %p287 = pneg %p103
        $region50: #{tpu_custom_call.1} parent=39 // pred_check_branch
          %289 = sbr.rel (%p287) target = $region52
        $region51: #{tpu_custom_call.1} parent=39 // pred_region
          %290 = dma.done [#allocation8], 1024
        $region52: #{tpu_custom_call.1} parent=39 // pred_fallthru
          _
        // Predicated region
        $region53: #{tpu_custom_call.1} parent=39 // pred_check
          %p291 = pneg %p124
        $region54: #{tpu_custom_call.1} parent=39 // pred_check_branch
          %293 = sbr.rel (%p291) target = $region56
        $region55: #{tpu_custom_call.1} parent=39 // pred_region
          %294 = dma.done [#allocation11], 1024
        $region56: #{tpu_custom_call.1} parent=39 // pred_fallthru
          _
        %s295 = sand.u32 %s48, 1
        %s296 = scalar_lea.sflag [#allocation5], %s295
        %s297 = sand.u32 %s48, 1
        %s298 = smul.addr %s297, 336
        %s299 = scalar_lea.vmem [#allocation4], %s298
        %p300 = pneg %p61
        %p301 = pneg %p58
        %p302 = pneg %p82
        %p303 = pneg %p79
        %p304 = pneg %p103
        %p305 = pneg %p100
        %p306 = pneg %p124
        %p307 = pneg %p121
        %p308 = pneg %p145
        %p309 = pneg %p142
        %p310 = pneg %p175
        %p311 = pneg %p172
        %s312 = sand.u32 %s162, 1
        %s313 = scalar_lea.sflag [#allocation6], %s312
        %s314 = sand.u32 %s162, 1
        %s315 = smul.addr %s314, 48
        %s316 = scalar_lea.vmem [#allocation12], %s315
        %p317 = scmp.eq.s32.totalorder %s28, 0
        %s318 = scalar_select %p317, %s29, 2
        %s319 = smul.u32 6, %s318
        %s320 = ssub.s32 13, %s319
        %p321 = scmp.lt.s32.totalorder %s320, 6
        %s322 = scalar_select %p321, %s320, 6
        %s323 = smul.u32 128, %s322
        %s324 = smul.u32 %s323, 7
        %p325 = scmp.eq.s32.totalorder %s28, 2
        %s326 = scalar_select %p325, %s29, 0
        %s327 = smul.u32 6, %s326
        %s328 = ssub.s32 13, %s327
        %p329 = scmp.lt.s32.totalorder %s328, 6
        %s330 = scalar_select %p329, %s328, 6
        %s331 = smul.u32 128, %s330
        %s333 = smul.u32 %s29, 48
        %v334 = vlaneseq
        %v335 = vshrl.u32 %v334, 7
        %v336 = vadd.s32 %v335, 8
        %v337 = vadd.s32 %v335, 16
        %v338 = vadd.s32 %v335, 24
        %v339 = vadd.s32 %v335, 32
        %v340 = vadd.s32 %v335, 40
        %v341 = vstv %s333
        %v342 = vadd.s32 %v335, %v341
        %v343 = vadd.s32 %v336, %v341
        %v344 = vadd.s32 %v337, %v341
        %v345 = vadd.s32 %v338, %v341
        %v346 = vadd.s32 %v339, %v341
        %v347 = vadd.s32 %v340, %v341
        %vm348 = vcmp.lt.s32.totalorder %v342, 100
        %vm349 = vcmp.lt.s32.totalorder %v343, 100
        %vm350 = vcmp.lt.s32.totalorder %v344, 100
        %vm351 = vcmp.lt.s32.totalorder %v345, 100
        %vm352 = vcmp.lt.s32.totalorder %v346, 100
        %vm353 = vcmp.lt.s32.totalorder %v347, 100
        %p354 = scmp.lt.s32.totalorder %s333, 100
        %s355 = scalar_select %p354, %s333, 100
        %s356 = scvt.s32.f32 %s355
        %s357 = sadd.s32 %s29, 1
        %s358 = smul.u32 %s357, 48
        %p359 = scmp.lt.s32.totalorder %s358, 100
        %s360 = scalar_select %p359, %s358, 100
        %s361 = scvt.s32.f32 %s360
        %s362 = ssub.f32 %s361, %s356
        %p363 = scmp.eq.s32.totalorder %s28, 0
        %p364 = scmp.eq.s32.totalorder %s29, 0
        %p365 = pnand %p363, %p364
        %p366 = pneg %p365
        // Predicated region
        $region57: #{tpu_custom_call.1} parent=39 // pred_check
          _
        $region58: #{tpu_custom_call.1} parent=39 // pred_check_branch
          %368 = sbr.rel (%p365) target = $region60
        $region59: #{tpu_custom_call.1} parent=39 // pred_region
          %369 = vst [vmem:[#allocation3] sm:$0xf] 0.0
        $region60: #{tpu_custom_call.1} parent=39 // pred_fallthru
          _
        // Predicated region
        $region61: #{tpu_custom_call.1} parent=39 // pred_check
          %p370 = pneg %p363
        $region62: #{tpu_custom_call.1} parent=39 // pred_check_branch
          %372 = sbr.rel (%p370) target = $region64
        $region63: #{tpu_custom_call.1} parent=39 // pred_region
          %v373 = vld [vmem:[%s278] sm:$0xff]
          %v374 = vld [vmem:[%s278 + $0x8] sm:$0xff]
          %v375 = vld [vmem:[%s278 + $0x10] sm:$0xff]
          %v376 = vld [vmem:[%s278 + $0x18] sm:$0xff]
          %v377 = vld [vmem:[%s278 + $0x20] sm:$0xff]
          %v378 = vld [vmem:[%s278 + $0x28] sm:$0xff]
          %v379 = vld [vmem:[%s278 + $0x30] sm:$0xff]
          %v380 = vld [vmem:[%s278 + $0x38] sm:$0xff]
          %v381 = vld [vmem:[%s278 + $0x40] sm:$0xff]
          %v382 = vld [vmem:[%s278 + $0x48] sm:$0xff]
          %v383 = vld [vmem:[%s278 + $0x50] sm:$0xff]
          %v384 = vld [vmem:[%s278 + $0x58] sm:$0xff]
          %v385 = vld [vmem:[%s278 + $0x60] sm:$0xff]
          %v386 = vld [vmem:[%s278 + $0x68] sm:$0xff]
          %v387 = vld [vmem:[%s278 + $0x70] sm:$0xff]
          %v388 = vld [vmem:[%s278 + $0x78] sm:$0xff]
          %v389 = vld [vmem:[%s278 + $0x80] sm:$0xff]
          %v390 = vld [vmem:[%s278 + $0x88] sm:$0xff]
          %v391 = vld [vmem:[%s278 + $0x90] sm:$0xff]
          %v392 = vld [vmem:[%s278 + $0x98] sm:$0xff]
          %v393 = vld [vmem:[%s278 + $0xa0] sm:$0xff]
          %v394 = vld [vmem:[%s278 + $0xa8] sm:$0xff]
          %v395 = vld [vmem:[%s278 + $0xb0] sm:$0xff]
          %v396 = vld [vmem:[%s278 + $0xb8] sm:$0xff]
          %v397 = vld [vmem:[%s278 + $0xc0] sm:$0xff]
          %v398 = vld [vmem:[%s278 + $0xc8] sm:$0xff]
          %v399 = vld [vmem:[%s278 + $0xd0] sm:$0xff]
          %v400 = vld [vmem:[%s278 + $0xd8] sm:$0xff]
          %v401 = vld [vmem:[%s278 + $0xe0] sm:$0xff]
          %v402 = vld [vmem:[%s278 + $0xe8] sm:$0xff]
          %v403 = vld [vmem:[%s278 + $0xf0] sm:$0xff]
          %v404 = vld [vmem:[%s278 + $0xf8] sm:$0xff]
          %v405 = vld [vmem:[%s278 + $0x100] sm:$0xff]
          %v406 = vld [vmem:[%s278 + $0x108] sm:$0xff]
          %v407 = vld [vmem:[%s278 + $0x110] sm:$0xff]
          %v408 = vld [vmem:[%s278 + $0x118] sm:$0xff]
          %v409 = vld [vmem:[%s278 + $0x120] sm:$0xff]
          %v410 = vld [vmem:[%s278 + $0x128] sm:$0xff]
          %v411 = vld [vmem:[%s278 + $0x130] sm:$0xff]
          %v412 = vld [vmem:[%s278 + $0x138] sm:$0xff]
          %v413 = vld [vmem:[%s278 + $0x140] sm:$0xff]
          %v414 = vld [vmem:[%s278 + $0x148] sm:$0xff]
          %v415 = vpack.c.bf16 %v380, %v373
          %v416 = vpack.c.bf16 %v381, %v374
          %v417 = vpack.c.bf16 %v382, %v375
          %v418 = vpack.c.bf16 %v383, %v376
          %v419 = vpack.c.bf16 %v384, %v377
          %v420 = vpack.c.bf16 %v385, %v378
          %v421 = vpack.c.bf16 %v386, %v379
          %v422 = vpack.c.bf16 %v394, %v387
          %v423 = vpack.c.bf16 %v395, %v388
          %v424 = vpack.c.bf16 %v396, %v389
          %v425 = vpack.c.bf16 %v397, %v390
          %v426 = vpack.c.bf16 %v398, %v391
          %v427 = vpack.c.bf16 %v399, %v392
          %v428 = vpack.c.bf16 %v400, %v393
          %v429 = vpack.c.bf16 %v408, %v401
          %v430 = vpack.c.bf16 %v409, %v402
          %v431 = vpack.c.bf16 %v410, %v403
          %v432 = vpack.c.bf16 %v411, %v404
          %v433 = vpack.c.bf16 %v412, %v405
          %v434 = vpack.c.bf16 %v413, %v406
          %v435 = vpack.c.bf16 %v414, %v407
          %v436 = vld [vmem:[#allocation7] sm:$0xf]
          %v437 = vld [vmem:[#allocation7 + $0x4] sm:$0xf]
          %v438 = vld [vmem:[#allocation7 + $0x8] sm:$0xf]
          %v439 = vld [vmem:[#allocation7 + $0xc] sm:$0xf]
          %v440 = vld [vmem:[#allocation7 + $0x10] sm:$0xf]
          %v441 = vld [vmem:[#allocation7 + $0x14] sm:$0xf]
          %v442 = vld [vmem:[#allocation7 + $0x18] sm:$0xf]
          %v443 = vld [vmem:[#allocation7 + $0x1c] sm:$0xf]
          %v444 = vld [vmem:[#allocation7 + $0x20] sm:$0xf]
          %v445 = vld [vmem:[#allocation7 + $0x24] sm:$0xf]
          %v446 = vld [vmem:[#allocation7 + $0x28] sm:$0xf]
          %v447 = vld [vmem:[#allocation7 + $0x2c] sm:$0xf]
          %v448 = vld [vmem:[#allocation7 + $0x30] sm:$0xf]
          %v449 = vld [vmem:[#allocation7 + $0x34] sm:$0xf]
          %v450 = vld [vmem:[#allocation7 + $0x38] sm:$0xf]
          %v451 = vld [vmem:[#allocation7 + $0x3c] sm:$0xf]
          %v452 = vld [vmem:[#allocation7 + $0x40] sm:$0xf]
          %v453 = vld [vmem:[#allocation7 + $0x44] sm:$0xf]
          %v454 = vld [vmem:[#allocation7 + $0x48] sm:$0xf]
          %v455 = vld [vmem:[#allocation7 + $0x4c] sm:$0xf]
          %v456 = vld [vmem:[#allocation7 + $0x50] sm:$0xf]
          %v457 = vld [vmem:[#allocation7 + $0x54] sm:$0xf]
          %v458 = vld [vmem:[#allocation7 + $0x58] sm:$0xf]
          %v459 = vld [vmem:[#allocation7 + $0x5c] sm:$0xf]
          %v460 = vld [vmem:[#allocation7 + $0x60] sm:$0xf]
          %v461 = vld [vmem:[#allocation7 + $0x64] sm:$0xf]
          %v462 = vld [vmem:[#allocation7 + $0x68] sm:$0xf]
          %v463 = vld [vmem:[#allocation7 + $0x6c] sm:$0xf]
          %v464 = vld [vmem:[#allocation7 + $0x70] sm:$0xf]
          %v465 = vld [vmem:[#allocation7 + $0x74] sm:$0xf]
          %v466 = vld [vmem:[#allocation7 + $0x78] sm:$0xf]
          %v467 = vld [vmem:[#allocation7 + $0x7c] sm:$0xf]
          %v468 = vld [vmem:[#allocation7 + $0x80] sm:$0xf]
          %v469 = vld [vmem:[#allocation7 + $0x84] sm:$0xf]
          %v470 = vld [vmem:[#allocation7 + $0x88] sm:$0xf]
          %v471 = vld [vmem:[#allocation7 + $0x8c] sm:$0xf]
          %v472 = vld [vmem:[#allocation7 + $0x90] sm:$0xf]
          %v473 = vld [vmem:[#allocation7 + $0x94] sm:$0xf]
          %v474 = vld [vmem:[#allocation7 + $0x98] sm:$0xf]
          %v475 = vld [vmem:[#allocation7 + $0x9c] sm:$0xf]
          %v476 = vld [vmem:[#allocation7 + $0xa0] sm:$0xf]
          %v477 = vld [vmem:[#allocation7 + $0xa4] sm:$0xf]
          %v478 = vld [vmem:[#allocation7 + $0xa8] sm:$0xf]
          %v479 = vld [vmem:[#allocation7 + $0xac] sm:$0xf]
          %v480 = vld [vmem:[#allocation7 + $0xb0] sm:$0xf]
          %v481 = vld [vmem:[#allocation7 + $0xb4] sm:$0xf]
          %v482 = vld [vmem:[#allocation7 + $0xb8] sm:$0xf]
          %v483 = vld [vmem:[#allocation7 + $0xbc] sm:$0xf]
          %v484 = vld [vmem:[#allocation7 + $0xc0] sm:$0xf]
          %v485 = vld [vmem:[#allocation7 + $0xc4] sm:$0xf]
          %v486 = vld [vmem:[#allocation7 + $0xc8] sm:$0xf]
          %v487 = vld [vmem:[#allocation7 + $0xcc] sm:$0xf]
          %v488 = vld [vmem:[#allocation7 + $0xd0] sm:$0xf]
          %v489 = vld [vmem:[#allocation7 + $0xd4] sm:$0xf]
          %v490 = vld [vmem:[#allocation7 + $0xd8] sm:$0xf]
          %v491 = vld [vmem:[#allocation7 + $0xdc] sm:$0xf]
          %v492 = vld [vmem:[#allocation7 + $0xe0] sm:$0xf]
          %v493 = vld [vmem:[#allocation7 + $0xe4] sm:$0xf]
          %v494 = vld [vmem:[#allocation7 + $0xe8] sm:$0xf]
          %v495 = vld [vmem:[#allocation7 + $0xec] sm:$0xf]
          %v496 = vld [vmem:[#allocation7 + $0xf0] sm:$0xf]
          %v497 = vld [vmem:[#allocation7 + $0xf4] sm:$0xf]
          %v498 = vld [vmem:[#allocation7 + $0xf8] sm:$0xf]
          %v499 = vld [vmem:[#allocation7 + $0xfc] sm:$0xf]
          %v500 = vld [vmem:[#allocation7 + $0x100] sm:$0xf]
          %v501 = vld [vmem:[#allocation7 + $0x104] sm:$0xf]
          %v502 = vld [vmem:[#allocation7 + $0x108] sm:$0xf]
          %v503 = vld [vmem:[#allocation7 + $0x10c] sm:$0xf]
          %v504 = vld [vmem:[#allocation7 + $0x110] sm:$0xf]
          %v505 = vld [vmem:[#allocation7 + $0x114] sm:$0xf]
          %v506 = vld [vmem:[#allocation7 + $0x118] sm:$0xf]
          %v507 = vld [vmem:[#allocation7 + $0x11c] sm:$0xf]
          %v508 = vld [vmem:[#allocation7 + $0x120] sm:$0xf]
          %v509 = vld [vmem:[#allocation7 + $0x124] sm:$0xf]
          %v510 = vld [vmem:[#allocation7 + $0x128] sm:$0xf]
          %v511 = vld [vmem:[#allocation7 + $0x12c] sm:$0xf]
          %v512 = vld [vmem:[#allocation7 + $0x130] sm:$0xf]
          %v513 = vld [vmem:[#allocation7 + $0x134] sm:$0xf]
          %v514 = vld [vmem:[#allocation7 + $0x138] sm:$0xf]
          %v515 = vld [vmem:[#allocation7 + $0x13c] sm:$0xf]
          %v516 = vld [vmem:[#allocation7 + $0x140] sm:$0xf]
          %v517 = vld [vmem:[#allocation7 + $0x144] sm:$0xf]
          %v518 = vld [vmem:[#allocation7 + $0x148] sm:$0xf]
          %v519 = vld [vmem:[#allocation7 + $0x14c] sm:$0xf]
          %v520 = vld [vmem:[#allocation7 + $0x150] sm:$0xf]
          %v521 = vld [vmem:[#allocation7 + $0x154] sm:$0xf]
          %v522 = vld [vmem:[#allocation7 + $0x158] sm:$0xf]
          %v523 = vld [vmem:[#allocation7 + $0x15c] sm:$0xf]
          %v524 = vld [vmem:[#allocation7 + $0x160] sm:$0xf]
          %v525 = vld [vmem:[#allocation7 + $0x164] sm:$0xf]
          %v526 = vld [vmem:[#allocation7 + $0x168] sm:$0xf]
          %v527 = vld [vmem:[#allocation7 + $0x16c] sm:$0xf]
          %v528 = vld [vmem:[#allocation7 + $0x170] sm:$0xf]
          %v529 = vld [vmem:[#allocation7 + $0x174] sm:$0xf]
          %v530 = vld [vmem:[#allocation7 + $0x178] sm:$0xf]
          %v531 = vld [vmem:[#allocation7 + $0x17c] sm:$0xf]
          %v532 = vld [vmem:[#allocation7 + $0x180] sm:$0xf]
          %v533 = vld [vmem:[#allocation7 + $0x184] sm:$0xf]
          %v534 = vld [vmem:[%s4] sm:$0x1]
          %v535 = vlaneseq
          %v536 = vshrl.u32 %v535, 7
          %v537 = vsub.s32 0, %v536
          %v538 = vrot.slane %v534, %v537
          %v637 = vunpack.c.l.b16 %v436
          %v638 = vunpack.c.l.b16 %v437
          %v639 = vunpack.c.l.b16 %v438
          %v640 = vunpack.c.l.b16 %v439
          %v641 = vunpack.c.l.b16 %v440
          %v642 = vunpack.c.l.b16 %v441
          %v643 = vunpack.c.l.b16 %v442
          %v644 = vunpack.c.l.b16 %v443
          %v645 = vunpack.c.l.b16 %v444
          %v646 = vunpack.c.l.b16 %v445
          %v647 = vunpack.c.l.b16 %v446
          %v648 = vunpack.c.l.b16 %v447
          %v649 = vunpack.c.l.b16 %v448
          %v650 = vunpack.c.l.b16 %v449
          %v651 = vunpack.c.l.b16 %v450
          %v652 = vunpack.c.l.b16 %v451
          %v653 = vunpack.c.l.b16 %v452
          %v654 = vunpack.c.l.b16 %v453
          %v655 = vunpack.c.l.b16 %v454
          %v656 = vunpack.c.l.b16 %v455
          %v657 = vunpack.c.l.b16 %v456
          %v658 = vunpack.c.l.b16 %v457
          %v659 = vunpack.c.l.b16 %v458
          %v660 = vunpack.c.l.b16 %v459
          %v661 = vunpack.c.l.b16 %v460
          %v662 = vunpack.c.l.b16 %v461
          %v663 = vunpack.c.l.b16 %v462
          %v664 = vunpack.c.l.b16 %v463
          %v665 = vunpack.c.l.b16 %v464
          %v666 = vunpack.c.l.b16 %v465
          %v667 = vunpack.c.l.b16 %v466
          %v668 = vunpack.c.l.b16 %v467
          %v669 = vunpack.c.l.b16 %v468
          %v670 = vunpack.c.l.b16 %v469
          %v671 = vunpack.c.l.b16 %v470
          %v672 = vunpack.c.l.b16 %v471
          %v673 = vunpack.c.l.b16 %v472
          %v674 = vunpack.c.l.b16 %v473
          %v675 = vunpack.c.l.b16 %v474
          %v676 = vunpack.c.l.b16 %v475
          %v677 = vunpack.c.l.b16 %v476
          %v678 = vunpack.c.l.b16 %v477
          %v679 = vunpack.c.l.b16 %v478
          %v680 = vunpack.c.l.b16 %v479
          %v681 = vunpack.c.l.b16 %v480
          %v682 = vunpack.c.l.b16 %v481
          %v683 = vunpack.c.l.b16 %v482
          %v684 = vunpack.c.l.b16 %v483
          %v685 = vunpack.c.l.b16 %v484
          %v686 = vunpack.c.l.b16 %v485
          %v687 = vunpack.c.l.b16 %v486
          %v688 = vunpack.c.l.b16 %v487
          %v689 = vunpack.c.l.b16 %v488
          %v690 = vunpack.c.l.b16 %v489
          %v691 = vunpack.c.l.b16 %v490
          %v692 = vunpack.c.l.b16 %v491
          %v693 = vunpack.c.l.b16 %v492
          %v694 = vunpack.c.l.b16 %v493
          %v695 = vunpack.c.l.b16 %v494
          %v696 = vunpack.c.l.b16 %v495
          %v697 = vunpack.c.l.b16 %v496
          %v698 = vunpack.c.l.b16 %v497
          %v699 = vunpack.c.l.b16 %v498
          %v700 = vunpack.c.l.b16 %v499
          %v701 = vunpack.c.l.b16 %v500
          %v702 = vunpack.c.l.b16 %v501
          %v703 = vunpack.c.l.b16 %v502
          %v704 = vunpack.c.l.b16 %v503
          %v705 = vunpack.c.l.b16 %v504
          %v706 = vunpack.c.l.b16 %v505
          %v707 = vunpack.c.l.b16 %v506
          %v708 = vunpack.c.l.b16 %v507
          %v709 = vunpack.c.l.b16 %v508
          %v710 = vunpack.c.l.b16 %v509
          %v711 = vunpack.c.l.b16 %v510
          %v712 = vunpack.c.l.b16 %v511
          %v713 = vunpack.c.l.b16 %v512
          %v714 = vunpack.c.l.b16 %v513
          %v715 = vunpack.c.l.b16 %v514
          %v716 = vunpack.c.l.b16 %v515
          %v717 = vunpack.c.l.b16 %v516
          %v718 = vunpack.c.l.b16 %v517
          %v719 = vunpack.c.l.b16 %v518
          %v720 = vunpack.c.l.b16 %v519
          %v721 = vunpack.c.l.b16 %v520
          %v722 = vunpack.c.l.b16 %v521
          %v723 = vunpack.c.l.b16 %v522
          %v724 = vunpack.c.l.b16 %v523
          %v725 = vunpack.c.l.b16 %v524
          %v726 = vunpack.c.l.b16 %v525
          %v727 = vunpack.c.l.b16 %v526
          %v728 = vunpack.c.l.b16 %v527
          %v729 = vunpack.c.l.b16 %v528
          %v730 = vunpack.c.l.b16 %v529
          %v731 = vunpack.c.l.b16 %v530
          %v732 = vunpack.c.l.b16 %v531
          %v733 = vunpack.c.l.b16 %v532
          %v734 = vunpack.c.l.b16 %v533
          %v735 = vpack.c.b16 %v638, %v637
          %v736 = vpack.c.b16 %v640, %v639
          %v737 = vpack.c.b16 %v642, %v641
          %v738 = vpack.c.b16 %v644, %v643
          %v739 = vpack.c.b16 %v646, %v645
          %v740 = vpack.c.b16 %v648, %v647
          %v741 = vpack.c.b16 %v650, %v649
          %v742 = vpack.c.b16 %v652, %v651
          %v743 = vpack.c.b16 %v654, %v653
          %v744 = vpack.c.b16 %v656, %v655
          %v745 = vpack.c.b16 %v658, %v657
          %v746 = vpack.c.b16 %v660, %v659
          %v747 = vpack.c.b16 %v662, %v661
          %v748 = vpack.c.b16 %v664, %v663
          %v749 = vpack.c.b16 %v666, %v665
          %v750 = vpack.c.b16 %v668, %v667
          %v751 = vpack.c.b16 %v670, %v669
          %v752 = vpack.c.b16 %v672, %v671
          %v753 = vpack.c.b16 %v674, %v673
          %v754 = vpack.c.b16 %v676, %v675
          %v755 = vpack.c.b16 %v678, %v677
          %v756 = vpack.c.b16 %v680, %v679
          %v757 = vpack.c.b16 %v682, %v681
          %v758 = vpack.c.b16 %v684, %v683
          %v759 = vpack.c.b16 %v686, %v685
          %v760 = vpack.c.b16 %v688, %v687
          %v761 = vpack.c.b16 %v690, %v689
          %v762 = vpack.c.b16 %v692, %v691
          %v763 = vpack.c.b16 %v694, %v693
          %v764 = vpack.c.b16 %v696, %v695
          %v765 = vpack.c.b16 %v698, %v697
          %v766 = vpack.c.b16 %v700, %v699
          %v767 = vpack.c.b16 %v702, %v701
          %v768 = vpack.c.b16 %v704, %v703
          %v769 = vpack.c.b16 %v706, %v705
          %v770 = vpack.c.b16 %v708, %v707
          %v771 = vpack.c.b16 %v710, %v709
          %v772 = vpack.c.b16 %v712, %v711
          %v773 = vpack.c.b16 %v714, %v713
          %v774 = vpack.c.b16 %v716, %v715
          %v775 = vpack.c.b16 %v718, %v717
          %v776 = vpack.c.b16 %v720, %v719
          %v777 = vpack.c.b16 %v722, %v721
          %v778 = vpack.c.b16 %v724, %v723
          %v779 = vpack.c.b16 %v726, %v725
          %v780 = vpack.c.b16 %v728, %v727
          %v781 = vpack.c.b16 %v730, %v729
          %v782 = vpack.c.b16 %v732, %v731
          %v783 = vpack.c.b16 %v734, %v733
          %vm833 = vcmask 130048
          %v835 = vsel %vm833, %v421, 0
          %v838 = vsel %vm833, %v428, 0
          %v841 = vsel %vm833, %v435, 0
          %843 = vmatprep.subr.bf16.mxu0 0
          %844 = vmatpush1.bf16.msra.mxu0 %v735
          %845 = vmatprep.subr.bf16.mxu0 0
          %846 = vmatpush1.bf16.msra.mxu0 %v736
          %847 = vmatprep.subr.bf16.mxu0 0
          %848 = vmatpush1.bf16.msra.mxu0 %v737
          %849 = vmatprep.subr.bf16.mxu0 0
          %850 = vmatpush1.bf16.msra.mxu0 %v738
          %851 = vmatprep.subr.bf16.mxu0 0
          %852 = vmatpush1.bf16.msra.mxu0 %v739
          %853 = vmatprep.subr.bf16.mxu0 0
          %854 = vmatpush1.bf16.msra.mxu0 %v740
          %855 = vmatprep.subr.bf16.mxu0 0
          %856 = vmatpush1.bf16.msra.mxu0 %v741
          %857 = vmatprep.subr.bf16.mxu0 0
          %858 = vmatpush1.bf16.msra.mxu0 %v742
          %859 = vmatprep.subr.bf16.mxu0 0
          %860 = vmatpush1.bf16.msra.mxu0 %v743
          %861 = vmatprep.subr.bf16.mxu0 0
          %862 = vmatpush1.bf16.msra.mxu0 %v744
          %863 = vmatprep.subr.bf16.mxu0 0
          %864 = vmatpush1.bf16.msra.mxu0 %v745
          %865 = vmatprep.subr.bf16.mxu0 0
          %866 = vmatpush1.bf16.msra.mxu0 %v746
          %867 = vmatprep.subr.bf16.mxu0 0
          %868 = vmatpush1.bf16.msra.mxu0 %v747
          %869 = vmatprep.subr.bf16.mxu0 0
          %870 = vmatpush1.bf16.msra.mxu0 %v748
          %871 = vmatprep.subr.bf16.mxu0 0
          %872 = vmatpush1.bf16.msra.mxu0 %v749
          %873 = vmatprep.subr.bf16.mxu0 0
          %874 = vmatpush1.bf16.msra.mxu0 %v750
          %875 = vmatprep.mubr.bf16.mxu0 %v416
          %876 = vmatmul.mubr.bf16.gmra.mrb[0].mxu0 %v415
          %v877 = vpop.f32.mrb[0].mxu0
          %v878 = vadd.f32 %v538, %v877
          %v879 = vpop.f32.mrb[0].mxu0
          %v880 = vpop.f32.mrb[0].mxu0
          %v881 = vadd.f32 %v538, %v880
          %v882 = vpop.f32.mrb[0].mxu0
          %883 = vmatprep.mubr.bf16.mxu0 %v423
          %884 = vmatmul.mubr.bf16.gmra.mrb[0].mxu0 %v422
          %v885 = vpop.f32.mrb[0].mxu0
          %v886 = vadd.f32 %v538, %v885
          %v887 = vpop.f32.mrb[0].mxu0
          %v888 = vpop.f32.mrb[0].mxu0
          %v889 = vadd.f32 %v538, %v888
          %v890 = vpop.f32.mrb[0].mxu0
          %891 = vmatprep.mubr.bf16.mxu0 %v430
          %892 = vmatmul.mubr.bf16.gmra.mrb[0].mxu0 %v429
          %v893 = vpop.f32.mrb[0].mxu0
          %v894 = vadd.f32 %v538, %v893
          %v895 = vpop.f32.mrb[0].mxu0
          %v896 = vpop.f32.mrb[0].mxu0
          %v897 = vadd.f32 %v538, %v896
          %v898 = vpop.f32.mrb[0].mxu0
          %899 = vdwg.mxu0
          %900 = vmatprep.subr.bf16.mxu0 0
          %901 = vmatpush1.bf16.msra.mxu0 %v751
          %902 = vmatprep.subr.bf16.mxu0 0
          %903 = vmatpush1.bf16.msra.mxu0 %v752
          %904 = vmatprep.subr.bf16.mxu0 0
          %905 = vmatpush1.bf16.msra.mxu0 %v753
          %906 = vmatprep.subr.bf16.mxu0 0
          %907 = vmatpush1.bf16.msra.mxu0 %v754
          %908 = vmatprep.subr.bf16.mxu0 0
          %909 = vmatpush1.bf16.msra.mxu0 %v755
          %910 = vmatprep.subr.bf16.mxu0 0
          %911 = vmatpush1.bf16.msra.mxu0 %v756
          %912 = vmatprep.subr.bf16.mxu0 0
          %913 = vmatpush1.bf16.msra.mxu0 %v757
          %914 = vmatprep.subr.bf16.mxu0 0
          %915 = vmatpush1.bf16.msra.mxu0 %v758
          %916 = vmatprep.subr.bf16.mxu0 0
          %917 = vmatpush1.bf16.msra.mxu0 %v759
          %918 = vmatprep.subr.bf16.mxu0 0
          %919 = vmatpush1.bf16.msra.mxu0 %v760
          %920 = vmatprep.subr.bf16.mxu0 0
          %921 = vmatpush1.bf16.msra.mxu0 %v761
          %922 = vmatprep.subr.bf16.mxu0 0
          %923 = vmatpush1.bf16.msra.mxu0 %v762
          %924 = vmatprep.subr.bf16.mxu0 0
          %925 = vmatpush1.bf16.msra.mxu0 %v763
          %926 = vmatprep.subr.bf16.mxu0 0
          %927 = vmatpush1.bf16.msra.mxu0 %v764
          %928 = vmatprep.subr.bf16.mxu0 0
          %929 = vmatpush1.bf16.msra.mxu0 %v765
          %930 = vmatprep.subr.bf16.mxu0 0
          %931 = vmatpush1.bf16.msra.mxu0 %v766
          %932 = vmatprep.mubr.bf16.mxu0 %v418
          %933 = vmatmul.mubr.bf16.gmra.mrb[0].mxu0 %v417
          %v934 = vpop.f32.mrb[0].mxu0
          %v935 = vadd.f32 %v878, %v934
          %v936 = vpop.f32.mrb[0].mxu0
          %v937 = vpop.f32.mrb[0].mxu0
          %v938 = vadd.f32 %v881, %v937
          %v939 = vpop.f32.mrb[0].mxu0
          %940 = vmatprep.mubr.bf16.mxu0 %v425
          %941 = vmatmul.mubr.bf16.gmra.mrb[0].mxu0 %v424
          %v942 = vpop.f32.mrb[0].mxu0
          %v943 = vadd.f32 %v886, %v942
          %v944 = vpop.f32.mrb[0].mxu0
          %v945 = vpop.f32.mrb[0].mxu0
          %v946 = vadd.f32 %v889, %v945
          %v947 = vpop.f32.mrb[0].mxu0
          %948 = vmatprep.mubr.bf16.mxu0 %v432
          %949 = vmatmul.mubr.bf16.gmra.mrb[0].mxu0 %v431
          %v950 = vpop.f32.mrb[0].mxu0
          %v951 = vadd.f32 %v894, %v950
          %v952 = vpop.f32.mrb[0].mxu0
          %v953 = vpop.f32.mrb[0].mxu0
          %v954 = vadd.f32 %v897, %v953
          %v955 = vpop.f32.mrb[0].mxu0
          %956 = vdwg.mxu0
          %957 = vmatprep.subr.bf16.mxu0 0
          %958 = vmatpush1.bf16.msra.mxu0 %v767
          %959 = vmatprep.subr.bf16.mxu0 0
          %960 = vmatpush1.bf16.msra.mxu0 %v768
          %961 = vmatprep.subr.bf16.mxu0 0
          %962 = vmatpush1.bf16.msra.mxu0 %v769
          %963 = vmatprep.subr.bf16.mxu0 0
          %964 = vmatpush1.bf16.msra.mxu0 %v770
          %965 = vmatprep.subr.bf16.mxu0 0
          %966 = vmatpush1.bf16.msra.mxu0 %v771
          %967 = vmatprep.subr.bf16.mxu0 0
          %968 = vmatpush1.bf16.msra.mxu0 %v772
          %969 = vmatprep.subr.bf16.mxu0 0
          %970 = vmatpush1.bf16.msra.mxu0 %v773
          %971 = vmatprep.subr.bf16.mxu0 0
          %972 = vmatpush1.bf16.msra.mxu0 %v774
          %973 = vmatprep.subr.bf16.mxu0 0
          %974 = vmatpush1.bf16.msra.mxu0 %v775
          %975 = vmatprep.subr.bf16.mxu0 0
          %976 = vmatpush1.bf16.msra.mxu0 %v776
          %977 = vmatprep.subr.bf16.mxu0 0
          %978 = vmatpush1.bf16.msra.mxu0 %v777
          %979 = vmatprep.subr.bf16.mxu0 0
          %980 = vmatpush1.bf16.msra.mxu0 %v778
          %981 = vmatprep.subr.bf16.mxu0 0
          %982 = vmatpush1.bf16.msra.mxu0 %v779
          %983 = vmatprep.subr.bf16.mxu0 0
          %984 = vmatpush1.bf16.msra.mxu0 %v780
          %985 = vmatprep.subr.bf16.mxu0 0
          %986 = vmatpush1.bf16.msra.mxu0 %v781
          %987 = vmatprep.subr.bf16.mxu0 0
          %988 = vmatpush1.bf16.msra.mxu0 %v782
          %989 = vmatprep.mubr.bf16.mxu0 %v420
          %990 = vmatmul.mubr.bf16.gmra.mrb[0].mxu0 %v419
          %v991 = vpop.f32.mrb[0].mxu0
          %v992 = vadd.f32 %v935, %v991
          %v993 = vpop.f32.mrb[0].mxu0
          %v994 = vpop.f32.mrb[0].mxu0
          %v995 = vadd.f32 %v938, %v994
          %v996 = vpop.f32.mrb[0].mxu0
          %997 = vmatprep.mubr.bf16.mxu0 %v427
          %998 = vmatmul.mubr.bf16.gmra.mrb[0].mxu0 %v426
          %v999 = vpop.f32.mrb[0].mxu0
          %v1000 = vadd.f32 %v943, %v999
          %v1001 = vpop.f32.mrb[0].mxu0
          %v1002 = vpop.f32.mrb[0].mxu0
          %v1003 = vadd.f32 %v946, %v1002
          %v1004 = vpop.f32.mrb[0].mxu0
          %1005 = vmatprep.mubr.bf16.mxu0 %v434
          %1006 = vmatmul.mubr.bf16.gmra.mrb[0].mxu0 %v433
          %v1007 = vpop.f32.mrb[0].mxu0
          %v1008 = vadd.f32 %v951, %v1007
          %v1009 = vpop.f32.mrb[0].mxu0
          %v1010 = vpop.f32.mrb[0].mxu0
          %v1011 = vadd.f32 %v954, %v1010
          %v1012 = vpop.f32.mrb[0].mxu0
          %1013 = vdwg.mxu0
          %1014 = vmatprep.subr.bf16.mxu0 0
          %1015 = vmatpush1.bf16.msra.mxu0 %v783
          %1016 = vmatprep.subr.bf16.mxu0 0
          %1017 = vmatpush1.bf16.msra.mxu0 0
          %1018 = vmatprep.subr.bf16.mxu0 0
          %1019 = vmatpush1.bf16.msra.mxu0 0
          %1020 = vmatprep.subr.bf16.mxu0 0
          %1021 = vmatpush1.bf16.msra.mxu0 0
          %1022 = vmatprep.subr.bf16.mxu0 0
          %1023 = vmatpush1.bf16.msra.mxu0 0
          %1024 = vmatprep.subr.bf16.mxu0 0
          %1025 = vmatpush1.bf16.msra.mxu0 0
          %1026 = vmatprep.subr.bf16.mxu0 0
          %1027 = vmatpush1.bf16.msra.mxu0 0
          %1028 = vmatprep.subr.bf16.mxu0 0
          %1029 = vmatpush1.bf16.msra.mxu0 0
          %1030 = vmatprep.subr.bf16.mxu0 0
          %1031 = vmatpush1.bf16.msra.mxu0 0
          %1032 = vmatprep.subr.bf16.mxu0 0
          %1033 = vmatpush1.bf16.msra.mxu0 0
          %1034 = vmatprep.subr.bf16.mxu0 0
          %1035 = vmatpush1.bf16.msra.mxu0 0
          %1036 = vmatprep.subr.bf16.mxu0 0
          %1037 = vmatpush1.bf16.msra.mxu0 0
          %1038 = vmatprep.subr.bf16.mxu0 0
          %1039 = vmatpush1.bf16.msra.mxu0 0
          %1040 = vmatprep.subr.bf16.mxu0 0
          %1041 = vmatpush1.bf16.msra.mxu0 0
          %1042 = vmatprep.subr.bf16.mxu0 0
          %1043 = vmatpush1.bf16.msra.mxu0 0
          %1044 = vmatprep.subr.bf16.mxu0 0
          %1045 = vmatpush1.bf16.msra.mxu0 0
          %1046 = vmatprep.mubr.bf16.mxu0 0
          %1047 = vmatmul.mubr.bf16.gmra.mrb[0].mxu0 %v835
          %v1048 = vpop.f32.mrb[0].mxu0
          %v1049 = vadd.f32 %v992, %v1048
          %v1050 = vpop.f32.mrb[0].mxu0
          %v1051 = vpop.f32.mrb[0].mxu0
          %v1052 = vadd.f32 %v995, %v1051
          %v1053 = vpop.f32.mrb[0].mxu0
          %1054 = vmatprep.mubr.bf16.mxu0 0
          %1055 = vmatmul.mubr.bf16.gmra.mrb[0].mxu0 %v838
          %v1056 = vpop.f32.mrb[0].mxu0
          %v1057 = vadd.f32 %v1000, %v1056
          %v1058 = vpop.f32.mrb[0].mxu0
          %v1059 = vpop.f32.mrb[0].mxu0
          %v1060 = vadd.f32 %v1003, %v1059
          %v1061 = vpop.f32.mrb[0].mxu0
          %1062 = vmatprep.mubr.bf16.mxu0 0
          %1063 = vmatmul.mubr.bf16.gmra.mrb[0].mxu0 %v841
          %v1064 = vpop.f32.mrb[0].mxu0
          %v1065 = vadd.f32 %v1008, %v1064
          %v1066 = vpop.f32.mrb[0].mxu0
          %v1067 = vpop.f32.mrb[0].mxu0
          %v1068 = vadd.f32 %v1011, %v1067
          %v1069 = vpop.f32.mrb[0].mxu0
          %1070 = vdwg.mxu0
          %v1071 = vsel %vm348, 1, 0
          %v1072 = vsel %vm349, 1, 0
          %v1073 = vsel %vm350, 1, 0
          %v1074 = vsel %vm351, 1, 0
          %v1075 = vsel %vm352, 1, 0
          %v1076 = vsel %vm353, 1, 0
          %vm1077 = vcmp.eq.s32.totalorder %v1071, 1
          %vm1078 = vcmp.eq.s32.totalorder %v1072, 1
          %vm1079 = vcmp.eq.s32.totalorder %v1073, 1
          %vm1080 = vcmp.eq.s32.totalorder %v1074, 1
          %vm1081 = vcmp.eq.s32.totalorder %v1075, 1
          %vm1082 = vcmp.eq.s32.totalorder %v1076, 1
          %v1083 = vsel %vm1077, %v1049, 0.0
          %v1084 = vsel %vm1078, %v1052, 0.0
          %v1085 = vsel %vm1079, %v1057, 0.0
          %v1086 = vsel %vm1080, %v1060, 0.0
          %v1087 = vsel %vm1081, %v1065, 0.0
          %v1088 = vsel %vm1082, %v1068, 0.0
          %v1089 = vpack.c.bf16 %v1084, %v1083
          %v1090 = vpack.c.bf16 %v1086, %v1085
          %v1091 = vpack.c.bf16 %v1088, %v1087
          %s1092 = sshra.s32 %s333, 4
          %s1093 = sand.u32 %s333, 15
          %s1094 = smul.addr %s1092, 8
          %s1095 = scalar_lea.vmem [#allocation2], %s1094
          %1096 = vst [vmem:[%s1095] sm:$0xff] %v1089
          %1097 = vst [vmem:[%s1095 + $0x8] sm:$0xff] %v1090
          %1098 = vst [vmem:[%s1095 + $0x10] sm:$0xff] %v1091
          %v1099 = vadd.f32 %v1083, %v1084
          %v1100 = vadd.f32 %v1099, %v1085
          %v1101 = vadd.f32 %v1100, %v1086
          %v1102 = vadd.f32 %v1101, %v1087
          %v1103 = vadd.f32 %v1102, %v1088
          %v1104 = vrot.slane %v1103, 4
          %v1105 = vadd.f32 %v1103, %v1104
          %v1106 = vrot.slane %v1105, 2
          %v1107 = vadd.f32 %v1105, %v1106
          %v1108 = vrot.slane %v1107, 1
          %v1109 = vadd.f32 %v1107, %v1108
          %v1110 = vstv %s362
          %v1111 = vrcp.pop %v1110
          %v1112 = vmul.f32 %v1109, %v1111
          %v1113 = vsub.f32 %v1083, %v1112
          %v1114 = vsub.f32 %v1084, %v1112
          %v1115 = vsub.f32 %v1085, %v1112
          %v1116 = vsub.f32 %v1086, %v1112
          %v1117 = vsub.f32 %v1087, %v1112
          %v1118 = vsub.f32 %v1088, %v1112
          %v1119 = vsel %vm1077, %v1113, 0.0
          %v1120 = vsel %vm1078, %v1114, 0.0
          %v1121 = vsel %vm1079, %v1115, 0.0
          %v1122 = vsel %vm1080, %v1116, 0.0
          %v1123 = vsel %vm1081, %v1117, 0.0
          %v1124 = vsel %vm1082, %v1118, 0.0
          %v1125 = vmul.f32 %v1119, %v1119
          %v1126 = vmul.f32 %v1120, %v1120
          %v1127 = vmul.f32 %v1121, %v1121
          %v1128 = vmul.f32 %v1122, %v1122
          %v1129 = vmul.f32 %v1123, %v1123
          %v1130 = vmul.f32 %v1124, %v1124
          %v1131 = vadd.f32 %v1125, %v1126
          %v1132 = vadd.f32 %v1131, %v1127
          %v1133 = vadd.f32 %v1132, %v1128
          %v1134 = vadd.f32 %v1133, %v1129
          %v1135 = vadd.f32 %v1134, %v1130
          %v1136 = vrot.slane %v1135, 4
          %v1137 = vadd.f32 %v1135, %v1136
          %v1138 = vrot.slane %v1137, 2
          %v1139 = vadd.f32 %v1137, %v1138
          %v1140 = vrot.slane %v1139, 1
          %v1141 = vadd.f32 %v1139, %v1140
          %v1142 = vld [vmem:[#allocation3] sm:$0x1]
          %v1143 = vld [vmem:[#allocation3 + $0x1] sm:$0x1]
          %v1144 = vsub.f32 %v1112, %v1142
          %s1145 = sadd.f32 %s356, %s362
          %v1146 = vstv %s1145
          %v1147 = vrcp.pop %v1146
          %s1148 = vtos %v1147
          %s1149 = smul.f32 %s362, %s1148
          %v1150 = vstv %s1149
          %v1151 = vmul.f32 %v1144, %v1150
          %v1152 = vadd.f32 %v1142, %v1151
          %1153 = vst [vmem:[#allocation3] sm:$0x1] %v1152
          %v1154 = vadd.f32 %v1143, %v1141
          %v1155 = vmul.f32 %v1144, %v1144
          %s1156 = smul.f32 %s356, %s362
          %v1157 = vstv %s1145
          %v1158 = vrcp.pop %v1157
          %s1159 = vtos %v1158
          %s1160 = smul.f32 %s1156, %s1159
          %v1161 = vstv %s1160
          %v1162 = vmul.f32 %v1155, %v1161
          %v1163 = vadd.f32 %v1154, %v1162
          %1164 = vst [vmem:[#allocation3 + $0x1] sm:$0x1] %v1163
        $region64: #{tpu_custom_call.1} parent=39 // pred_fallthru
          _
        %p1165 = scmp.eq.s32.totalorder %s28, 1
        // Predicated region
        $region65: #{tpu_custom_call.1} parent=39 // pred_check
          %p1166 = pneg %p1165
        $region66: #{tpu_custom_call.1} parent=39 // pred_check_branch
          %1168 = sbr.rel (%p1166) target = $region68
        $region67: #{tpu_custom_call.1} parent=39 // pred_region
          %s1169 = sshra.s32 %s333, 4
          %s1170 = sand.u32 %s333, 15
          %s1171 = smul.addr %s1169, 8
          %s1172 = scalar_lea.vmem [#allocation2], %s1171
          %v1173 = vld [vmem:[%s1172] sm:$0xff]
          %v1174 = vld [vmem:[%s1172 + $0x8] sm:$0xff]
          %v1175 = vld [vmem:[%s1172 + $0x10] sm:$0xff]
          %v1176 = vunpack.c.l.bf16 %v1173
          %v1177 = vunpack.c.h.bf16 %v1173
          %v1178 = vunpack.c.l.bf16 %v1174
          %v1179 = vunpack.c.h.bf16 %v1174
          %v1180 = vunpack.c.l.bf16 %v1175
          %v1181 = vunpack.c.h.bf16 %v1175
          %v1182 = vld [vmem:[#allocation3] sm:$0x1]
          %v1183 = vld [vmem:[#allocation3 + $0x1] sm:$0x1]
          %v1184 = vmul.f32 %v1183, 0.01
          %v1185 = vlaneseq
          %v1186 = vshrl.u32 %v1185, 7
          %v1187 = vsub.s32 0, %v1186
          %v1188 = vrot.slane %v1182, %v1187
          %v1189 = vsub.f32 %v1176, %v1188
          %v1190 = vsub.f32 %v1177, %v1188
          %v1191 = vsub.f32 %v1178, %v1188
          %v1192 = vsub.f32 %v1179, %v1188
          %v1193 = vsub.f32 %v1180, %v1188
          %v1194 = vsub.f32 %v1181, %v1188
          %v1195 = vadd.f32 %v1184, 1e-05
          %v1196 = vrsqrt.pop %v1195
          %v1197 = vlaneseq
          %v1198 = vshrl.u32 %v1197, 7
          %v1199 = vsub.s32 0, %v1198
          %v1200 = vrot.slane %v1196, %v1199
          %v1201 = vmul.f32 %v1189, %v1200
          %v1202 = vmul.f32 %v1190, %v1200
          %v1203 = vmul.f32 %v1191, %v1200
          %v1204 = vmul.f32 %v1192, %v1200
          %v1205 = vmul.f32 %v1193, %v1200
          %v1206 = vmul.f32 %v1194, %v1200
          %v1207 = vld [vmem:[%s4 + $0x1] sm:$0x1]
          %v1208 = vlaneseq
          %v1209 = vshrl.u32 %v1208, 7
          %v1210 = vsub.s32 0, %v1209
          %v1211 = vrot.slane %v1207, %v1210
          %v1212 = vmul.f32 %v1201, %v1211
          %v1213 = vmul.f32 %v1202, %v1211
          %v1214 = vmul.f32 %v1203, %v1211
          %v1215 = vmul.f32 %v1204, %v1211
          %v1216 = vmul.f32 %v1205, %v1211
          %v1217 = vmul.f32 %v1206, %v1211
          %v1218 = vld [vmem:[%s4 + $0x2] sm:$0x1]
          %v1219 = vlaneseq
          %v1220 = vshrl.u32 %v1219, 7
          %v1221 = vsub.s32 0, %v1220
          %v1222 = vrot.slane %v1218, %v1221
          %v1223 = vadd.f32 %v1212, %v1222
          %v1224 = vadd.f32 %v1213, %v1222
          %v1225 = vadd.f32 %v1214, %v1222
          %v1226 = vadd.f32 %v1215, %v1222
          %v1227 = vadd.f32 %v1216, %v1222
          %v1228 = vadd.f32 %v1217, %v1222
          %v1229 = vmax.f32 %v1223, 0.0
          %v1230 = vmax.f32 %v1224, 0.0
          %v1231 = vmax.f32 %v1225, 0.0
          %v1232 = vmax.f32 %v1226, 0.0
          %v1233 = vmax.f32 %v1227, 0.0
          %v1234 = vmax.f32 %v1228, 0.0
          %v1235 = vpack.c.bf16 %v1230, %v1229
          %v1236 = vpack.c.bf16 %v1232, %v1231
          %v1237 = vpack.c.bf16 %v1234, %v1233
          %v1238 = vld [vmem:[#allocation9] sm:$0xf]
          %v1239 = vld [vmem:[#allocation9 + $0x4] sm:$0xf]
          %v1240 = vld [vmem:[#allocation9 + $0x8] sm:$0xf]
          %v1241 = vld [vmem:[#allocation9 + $0xc] sm:$0xf]
          %v1242 = vld [vmem:[#allocation9 + $0x10] sm:$0xf]
          %v1243 = vld [vmem:[#allocation9 + $0x14] sm:$0xf]
          %v1244 = vld [vmem:[#allocation9 + $0x18] sm:$0xf]
          %v1245 = vld [vmem:[#allocation9 + $0x1c] sm:$0xf]
          %v1246 = vld [vmem:[#allocation9 + $0x20] sm:$0xf]
          %v1247 = vld [vmem:[#allocation9 + $0x24] sm:$0xf]
          %v1248 = vld [vmem:[#allocation9 + $0x28] sm:$0xf]
          %v1249 = vld [vmem:[#allocation9 + $0x2c] sm:$0xf]
          %v1250 = vld [vmem:[#allocation9 + $0x30] sm:$0xf]
          %v1251 = vld [vmem:[#allocation9 + $0x34] sm:$0xf]
          %v1252 = vld [vmem:[#allocation9 + $0x38] sm:$0xf]
          %v1253 = vld [vmem:[#allocation9 + $0x3c] sm:$0xf]
          %v1254 = vld [vmem:[%s4 + $0x3] sm:$0x1]
          %v1255 = vlaneseq
          %v1256 = vshrl.u32 %v1255, 7
          %v1257 = vsub.s32 0, %v1256
          %v1258 = vrot.slane %v1254, %v1257
          %v1275 = vunpack.c.l.b16 %v1238
          %v1276 = vunpack.c.l.b16 %v1239
          %v1277 = vunpack.c.l.b16 %v1240
          %v1278 = vunpack.c.l.b16 %v1241
          %v1279 = vunpack.c.l.b16 %v1242
          %v1280 = vunpack.c.l.b16 %v1243
          %v1281 = vunpack.c.l.b16 %v1244
          %v1282 = vunpack.c.l.b16 %v1245
          %v1283 = vunpack.c.l.b16 %v1246
          %v1284 = vunpack.c.l.b16 %v1247
          %v1285 = vunpack.c.l.b16 %v1248
          %v1286 = vunpack.c.l.b16 %v1249
          %v1287 = vunpack.c.l.b16 %v1250
          %v1288 = vunpack.c.l.b16 %v1251
          %v1289 = vunpack.c.l.b16 %v1252
          %v1290 = vunpack.c.l.b16 %v1253
          %v1291 = vpack.c.b16 %v1276, %v1275
          %v1292 = vpack.c.b16 %v1278, %v1277
          %v1293 = vpack.c.b16 %v1280, %v1279
          %v1294 = vpack.c.b16 %v1282, %v1281
          %v1295 = vpack.c.b16 %v1284, %v1283
          %v1296 = vpack.c.b16 %v1286, %v1285
          %v1297 = vpack.c.b16 %v1288, %v1287
          %v1298 = vpack.c.b16 %v1290, %v1289
          %1307 = vmatprep.subr.bf16.mxu0 0
          %1308 = vmatpush1.bf16.msra.mxu0 %v1291
          %1309 = vmatprep.subr.bf16.mxu0 0
          %1310 = vmatpush1.bf16.msra.mxu0 %v1292
          %1311 = vmatprep.subr.bf16.mxu0 0
          %1312 = vmatpush1.bf16.msra.mxu0 %v1293
          %1313 = vmatprep.subr.bf16.mxu0 0
          %1314 = vmatpush1.bf16.msra.mxu0 %v1294
          %1315 = vmatprep.subr.bf16.mxu0 0
          %1316 = vmatpush1.bf16.msra.mxu0 %v1295
          %1317 = vmatprep.subr.bf16.mxu0 0
          %1318 = vmatpush1.bf16.msra.mxu0 %v1296
          %1319 = vmatprep.subr.bf16.mxu0 0
          %1320 = vmatpush1.bf16.msra.mxu0 %v1297
          %1321 = vmatprep.subr.bf16.mxu0 0
          %1322 = vmatpush1.bf16.msra.mxu0 %v1298
          %1323 = vmatprep.subr.bf16.mxu0 0
          %1324 = vmatpush1.bf16.msra.mxu0 0
          %1325 = vmatprep.subr.bf16.mxu0 0
          %1326 = vmatpush1.bf16.msra.mxu0 0
          %1327 = vmatprep.subr.bf16.mxu0 0
          %1328 = vmatpush1.bf16.msra.mxu0 0
          %1329 = vmatprep.subr.bf16.mxu0 0
          %1330 = vmatpush1.bf16.msra.mxu0 0
          %1331 = vmatprep.subr.bf16.mxu0 0
          %1332 = vmatpush1.bf16.msra.mxu0 0
          %1333 = vmatprep.subr.bf16.mxu0 0
          %1334 = vmatpush1.bf16.msra.mxu0 0
          %1335 = vmatprep.subr.bf16.mxu0 0
          %1336 = vmatpush1.bf16.msra.mxu0 0
          %1337 = vmatprep.subr.bf16.mxu0 0
          %1338 = vmatpush1.bf16.msra.mxu0 0
          %1339 = vmatprep.mubr.bf16.mxu0 0
          %1340 = vmatmul.mubr.bf16.gmra.mrb[0].mxu0 %v1235
          %v1341 = vpop.f32.mrb[0].mxu0
          %v1342 = vadd.f32 %v1258, %v1341
          %v1343 = vpop.f32.mrb[0].mxu0
          %v1344 = vpop.f32.mrb[0].mxu0
          %v1345 = vadd.f32 %v1258, %v1344
          %v1346 = vpop.f32.mrb[0].mxu0
          %1347 = vmatprep.mubr.bf16.mxu0 0
          %1348 = vmatmul.mubr.bf16.gmra.mrb[0].mxu0 %v1236
          %v1349 = vpop.f32.mrb[0].mxu0
          %v1350 = vadd.f32 %v1258, %v1349
          %v1351 = vpop.f32.mrb[0].mxu0
          %v1352 = vpop.f32.mrb[0].mxu0
          %v1353 = vadd.f32 %v1258, %v1352
          %v1354 = vpop.f32.mrb[0].mxu0
          %1355 = vmatprep.mubr.bf16.mxu0 0
          %1356 = vmatmul.mubr.bf16.gmra.mrb[0].mxu0 %v1237
          %v1357 = vpop.f32.mrb[0].mxu0
          %v1358 = vadd.f32 %v1258, %v1357
          %v1359 = vpop.f32.mrb[0].mxu0
          %v1360 = vpop.f32.mrb[0].mxu0
          %v1361 = vadd.f32 %v1258, %v1360
          %v1362 = vpop.f32.mrb[0].mxu0
          %1363 = vdwg.mxu0
          %v1364 = vsel %vm348, 1, 0
          %v1365 = vsel %vm349, 1, 0
          %v1366 = vsel %vm350, 1, 0
          %v1367 = vsel %vm351, 1, 0
          %v1368 = vsel %vm352, 1, 0
          %v1369 = vsel %vm353, 1, 0
          %vm1370 = vcmp.eq.s32.totalorder %v1364, 1
          %vm1371 = vcmp.eq.s32.totalorder %v1365, 1
          %vm1372 = vcmp.eq.s32.totalorder %v1366, 1
          %vm1373 = vcmp.eq.s32.totalorder %v1367, 1
          %vm1374 = vcmp.eq.s32.totalorder %v1368, 1
          %vm1375 = vcmp.eq.s32.totalorder %v1369, 1
          %v1376 = vsel %vm1370, %v1342, 0.0
          %v1377 = vsel %vm1371, %v1345, 0.0
          %v1378 = vsel %vm1372, %v1350, 0.0
          %v1379 = vsel %vm1373, %v1353, 0.0
          %v1380 = vsel %vm1374, %v1358, 0.0
          %v1381 = vsel %vm1375, %v1361, 0.0
          %v1382 = vpack.c.bf16 %v1377, %v1376
          %v1383 = vpack.c.bf16 %v1379, %v1378
          %v1384 = vpack.c.bf16 %v1381, %v1380
          %1385 = vst [vmem:[%s1172] sm:$0xff] %v1382
          %1386 = vst [vmem:[%s1172 + $0x8] sm:$0xff] %v1383
          %1387 = vst [vmem:[%s1172 + $0x10] sm:$0xff] %v1384
          %v1388 = vadd.f32 %v1376, %v1377
          %v1389 = vadd.f32 %v1388, %v1378
          %v1390 = vadd.f32 %v1389, %v1379
          %v1391 = vadd.f32 %v1390, %v1380
          %v1392 = vadd.f32 %v1391, %v1381
          %v1393 = vrot.slane %v1392, 4
          %v1394 = vadd.f32 %v1392, %v1393
          %v1395 = vrot.slane %v1394, 2
          %v1396 = vadd.f32 %v1394, %v1395
          %v1397 = vrot.slane %v1396, 1
          %v1398 = vadd.f32 %v1396, %v1397
          %v1399 = vstv %s362
          %v1400 = vrcp.pop %v1399
          %v1401 = vmul.f32 %v1398, %v1400
          %v1402 = vsub.f32 %v1376, %v1401
          %v1403 = vsub.f32 %v1377, %v1401
          %v1404 = vsub.f32 %v1378, %v1401
          %v1405 = vsub.f32 %v1379, %v1401
          %v1406 = vsub.f32 %v1380, %v1401
          %v1407 = vsub.f32 %v1381, %v1401
          %v1408 = vsel %vm1370, %v1402, 0.0
          %v1409 = vsel %vm1371, %v1403, 0.0
          %v1410 = vsel %vm1372, %v1404, 0.0
          %v1411 = vsel %vm1373, %v1405, 0.0
          %v1412 = vsel %vm1374, %v1406, 0.0
          %v1413 = vsel %vm1375, %v1407, 0.0
          %v1414 = vmul.f32 %v1408, %v1408
          %v1415 = vmul.f32 %v1409, %v1409
          %v1416 = vmul.f32 %v1410, %v1410
          %v1417 = vmul.f32 %v1411, %v1411
          %v1418 = vmul.f32 %v1412, %v1412
          %v1419 = vmul.f32 %v1413, %v1413
          %v1420 = vadd.f32 %v1414, %v1415
          %v1421 = vadd.f32 %v1420, %v1416
          %v1422 = vadd.f32 %v1421, %v1417
          %v1423 = vadd.f32 %v1422, %v1418
          %v1424 = vadd.f32 %v1423, %v1419
          %v1425 = vrot.slane %v1424, 4
          %v1426 = vadd.f32 %v1424, %v1425
          %v1427 = vrot.slane %v1426, 2
          %v1428 = vadd.f32 %v1426, %v1427
          %v1429 = vrot.slane %v1428, 1
          %v1430 = vadd.f32 %v1428, %v1429
          %v1431 = vld [vmem:[#allocation3 + $0x2] sm:$0x1]
          %v1432 = vld [vmem:[#allocation3 + $0x3] sm:$0x1]
          %v1433 = vsub.f32 %v1401, %v1431
          %s1434 = sadd.f32 %s356, %s362
          %v1435 = vstv %s1434
          %v1436 = vrcp.pop %v1435
          %s1437 = vtos %v1436
          %s1438 = smul.f32 %s362, %s1437
          %v1439 = vstv %s1438
          %v1440 = vmul.f32 %v1433, %v1439
          %v1441 = vadd.f32 %v1431, %v1440
          %1442 = vst [vmem:[#allocation3 + $0x2] sm:$0x1] %v1441
          %v1443 = vadd.f32 %v1432, %v1430
          %v1444 = vmul.f32 %v1433, %v1433
          %s1445 = smul.f32 %s356, %s362
          %v1446 = vstv %s1434
          %v1447 = vrcp.pop %v1446
          %s1448 = vtos %v1447
          %s1449 = smul.f32 %s1445, %s1448
          %v1450 = vstv %s1449
          %v1451 = vmul.f32 %v1444, %v1450
          %v1452 = vadd.f32 %v1443, %v1451
          %1453 = vst [vmem:[#allocation3 + $0x3] sm:$0x1] %v1452
        $region68: #{tpu_custom_call.1} parent=39 // pred_fallthru
          _
        %p1454 = scmp.eq.s32.totalorder %s28, 2
        // Predicated region
        $region69: #{tpu_custom_call.1} parent=39 // pred_check
          %p1455 = pneg %p1454
        $region70: #{tpu_custom_call.1} parent=39 // pred_check_branch
          %1457 = sbr.rel (%p1455) target = $region72
        $region71: #{tpu_custom_call.1} parent=39 // pred_region
          %s1458 = sshra.s32 %s333, 4
          %s1459 = sand.u32 %s333, 15
          %s1460 = smul.addr %s1458, 8
          %s1461 = scalar_lea.vmem [#allocation2], %s1460
          %v1462 = vld [vmem:[%s1461] sm:$0xff]
          %v1463 = vld [vmem:[%s1461 + $0x8] sm:$0xff]
          %v1464 = vld [vmem:[%s1461 + $0x10] sm:$0xff]
          %v1465 = vunpack.c.l.bf16 %v1462
          %v1466 = vunpack.c.h.bf16 %v1462
          %v1467 = vunpack.c.l.bf16 %v1463
          %v1468 = vunpack.c.h.bf16 %v1463
          %v1469 = vunpack.c.l.bf16 %v1464
          %v1470 = vunpack.c.h.bf16 %v1464
          %v1471 = vld [vmem:[#allocation3 + $0x2] sm:$0x1]
          %v1472 = vld [vmem:[#allocation3 + $0x3] sm:$0x1]
          %v1473 = vmul.f32 %v1472, 0.01
          %v1474 = vlaneseq
          %v1475 = vshrl.u32 %v1474, 7
          %v1476 = vsub.s32 0, %v1475
          %v1477 = vrot.slane %v1471, %v1476
          %v1478 = vsub.f32 %v1465, %v1477
          %v1479 = vsub.f32 %v1466, %v1477
          %v1480 = vsub.f32 %v1467, %v1477
          %v1481 = vsub.f32 %v1468, %v1477
          %v1482 = vsub.f32 %v1469, %v1477
          %v1483 = vsub.f32 %v1470, %v1477
          %v1484 = vadd.f32 %v1473, 1e-05
          %v1485 = vrsqrt.pop %v1484
          %v1486 = vlaneseq
          %v1487 = vshrl.u32 %v1486, 7
          %v1488 = vsub.s32 0, %v1487
          %v1489 = vrot.slane %v1485, %v1488
          %v1490 = vmul.f32 %v1478, %v1489
          %v1491 = vmul.f32 %v1479, %v1489
          %v1492 = vmul.f32 %v1480, %v1489
          %v1493 = vmul.f32 %v1481, %v1489
          %v1494 = vmul.f32 %v1482, %v1489
          %v1495 = vmul.f32 %v1483, %v1489
          %v1496 = vld [vmem:[%s4 + $0x4] sm:$0x1]
          %v1497 = vlaneseq
          %v1498 = vshrl.u32 %v1497, 7
          %v1499 = vsub.s32 0, %v1498
          %v1500 = vrot.slane %v1496, %v1499
          %v1501 = vmul.f32 %v1490, %v1500
          %v1502 = vmul.f32 %v1491, %v1500
          %v1503 = vmul.f32 %v1492, %v1500
          %v1504 = vmul.f32 %v1493, %v1500
          %v1505 = vmul.f32 %v1494, %v1500
          %v1506 = vmul.f32 %v1495, %v1500
          %v1507 = vld [vmem:[%s4 + $0x5] sm:$0x1]
          %v1508 = vlaneseq
          %v1509 = vshrl.u32 %v1508, 7
          %v1510 = vsub.s32 0, %v1509
          %v1511 = vrot.slane %v1507, %v1510
          %v1512 = vadd.f32 %v1501, %v1511
          %v1513 = vadd.f32 %v1502, %v1511
          %v1514 = vadd.f32 %v1503, %v1511
          %v1515 = vadd.f32 %v1504, %v1511
          %v1516 = vadd.f32 %v1505, %v1511
          %v1517 = vadd.f32 %v1506, %v1511
          %v1518 = vmax.f32 %v1512, 0.0
          %v1519 = vmax.f32 %v1513, 0.0
          %v1520 = vmax.f32 %v1514, 0.0
          %v1521 = vmax.f32 %v1515, 0.0
          %v1522 = vmax.f32 %v1516, 0.0
          %v1523 = vmax.f32 %v1517, 0.0
          %v1524 = vpack.c.bf16 %v1519, %v1518
          %v1525 = vpack.c.bf16 %v1521, %v1520
          %v1526 = vpack.c.bf16 %v1523, %v1522
          %v1527 = vld [vmem:[#allocation10] sm:$0xf]
          %v1528 = vld [vmem:[#allocation10 + $0x4] sm:$0xf]
          %v1529 = vld [vmem:[#allocation10 + $0x8] sm:$0xf]
          %v1530 = vld [vmem:[#allocation10 + $0xc] sm:$0xf]
          %v1531 = vld [vmem:[#allocation10 + $0x10] sm:$0xf]
          %v1532 = vld [vmem:[#allocation10 + $0x14] sm:$0xf]
          %v1533 = vld [vmem:[#allocation10 + $0x18] sm:$0xf]
          %v1534 = vld [vmem:[#allocation10 + $0x1c] sm:$0xf]
          %v1535 = vld [vmem:[#allocation10 + $0x20] sm:$0xf]
          %v1536 = vld [vmem:[#allocation10 + $0x24] sm:$0xf]
          %v1537 = vld [vmem:[#allocation10 + $0x28] sm:$0xf]
          %v1538 = vld [vmem:[#allocation10 + $0x2c] sm:$0xf]
          %v1539 = vld [vmem:[#allocation10 + $0x30] sm:$0xf]
          %v1540 = vld [vmem:[#allocation10 + $0x34] sm:$0xf]
          %v1541 = vld [vmem:[#allocation10 + $0x38] sm:$0xf]
          %v1542 = vld [vmem:[#allocation10 + $0x3c] sm:$0xf]
          %v1543 = vld [vmem:[%s4 + $0x6] sm:$0x1]
          %v1544 = vlaneseq
          %v1545 = vshrl.u32 %v1544, 7
          %v1546 = vsub.s32 0, %v1545
          %v1547 = vrot.slane %v1543, %v1546
          %v1564 = vunpack.c.l.b16 %v1527
          %v1565 = vunpack.c.l.b16 %v1528
          %v1566 = vunpack.c.l.b16 %v1529
          %v1567 = vunpack.c.l.b16 %v1530
          %v1568 = vunpack.c.l.b16 %v1531
          %v1569 = vunpack.c.l.b16 %v1532
          %v1570 = vunpack.c.l.b16 %v1533
          %v1571 = vunpack.c.l.b16 %v1534
          %v1572 = vunpack.c.l.b16 %v1535
          %v1573 = vunpack.c.l.b16 %v1536
          %v1574 = vunpack.c.l.b16 %v1537
          %v1575 = vunpack.c.l.b16 %v1538
          %v1576 = vunpack.c.l.b16 %v1539
          %v1577 = vunpack.c.l.b16 %v1540
          %v1578 = vunpack.c.l.b16 %v1541
          %v1579 = vunpack.c.l.b16 %v1542
          %v1580 = vpack.c.b16 %v1565, %v1564
          %v1581 = vpack.c.b16 %v1567, %v1566
          %v1582 = vpack.c.b16 %v1569, %v1568
          %v1583 = vpack.c.b16 %v1571, %v1570
          %v1584 = vpack.c.b16 %v1573, %v1572
          %v1585 = vpack.c.b16 %v1575, %v1574
          %v1586 = vpack.c.b16 %v1577, %v1576
          %v1587 = vpack.c.b16 %v1579, %v1578
          %1596 = vmatprep.subr.bf16.mxu0 0
          %1597 = vmatpush1.bf16.msra.mxu0 %v1580
          %1598 = vmatprep.subr.bf16.mxu0 0
          %1599 = vmatpush1.bf16.msra.mxu0 %v1581
          %1600 = vmatprep.subr.bf16.mxu0 0
          %1601 = vmatpush1.bf16.msra.mxu0 %v1582
          %1602 = vmatprep.subr.bf16.mxu0 0
          %1603 = vmatpush1.bf16.msra.mxu0 %v1583
          %1604 = vmatprep.subr.bf16.mxu0 0
          %1605 = vmatpush1.bf16.msra.mxu0 %v1584
          %1606 = vmatprep.subr.bf16.mxu0 0
          %1607 = vmatpush1.bf16.msra.mxu0 %v1585
          %1608 = vmatprep.subr.bf16.mxu0 0
          %1609 = vmatpush1.bf16.msra.mxu0 %v1586
          %1610 = vmatprep.subr.bf16.mxu0 0
          %1611 = vmatpush1.bf16.msra.mxu0 %v1587
          %1612 = vmatprep.subr.bf16.mxu0 0
          %1613 = vmatpush1.bf16.msra.mxu0 0
          %1614 = vmatprep.subr.bf16.mxu0 0
          %1615 = vmatpush1.bf16.msra.mxu0 0
          %1616 = vmatprep.subr.bf16.mxu0 0
          %1617 = vmatpush1.bf16.msra.mxu0 0
          %1618 = vmatprep.subr.bf16.mxu0 0
          %1619 = vmatpush1.bf16.msra.mxu0 0
          %1620 = vmatprep.subr.bf16.mxu0 0
          %1621 = vmatpush1.bf16.msra.mxu0 0
          %1622 = vmatprep.subr.bf16.mxu0 0
          %1623 = vmatpush1.bf16.msra.mxu0 0
          %1624 = vmatprep.subr.bf16.mxu0 0
          %1625 = vmatpush1.bf16.msra.mxu0 0
          %1626 = vmatprep.subr.bf16.mxu0 0
          %1627 = vmatpush1.bf16.msra.mxu0 0
          %1628 = vmatprep.mubr.bf16.mxu0 0
          %1629 = vmatmul.mubr.bf16.gmra.mrb[0].mxu0 %v1524
          %v1630 = vpop.f32.mrb[0].mxu0
          %v1631 = vadd.f32 %v1547, %v1630
          %v1632 = vpop.f32.mrb[0].mxu0
          %v1633 = vpop.f32.mrb[0].mxu0
          %v1634 = vadd.f32 %v1547, %v1633
          %v1635 = vpop.f32.mrb[0].mxu0
          %1636 = vmatprep.mubr.bf16.mxu0 0
          %1637 = vmatmul.mubr.bf16.gmra.mrb[0].mxu0 %v1525
          %v1638 = vpop.f32.mrb[0].mxu0
          %v1639 = vadd.f32 %v1547, %v1638
          %v1640 = vpop.f32.mrb[0].mxu0
          %v1641 = vpop.f32.mrb[0].mxu0
          %v1642 = vadd.f32 %v1547, %v1641
          %v1643 = vpop.f32.mrb[0].mxu0
          %1644 = vmatprep.mubr.bf16.mxu0 0
          %1645 = vmatmul.mubr.bf16.gmra.mrb[0].mxu0 %v1526
          %v1646 = vpop.f32.mrb[0].mxu0
          %v1647 = vadd.f32 %v1547, %v1646
          %v1648 = vpop.f32.mrb[0].mxu0
          %v1649 = vpop.f32.mrb[0].mxu0
          %v1650 = vadd.f32 %v1547, %v1649
          %v1651 = vpop.f32.mrb[0].mxu0
          %1652 = vdwg.mxu0
          %v1653 = vlaneseq
          %v1654 = vand.u32 %v1653, 127
          %vm1655 = vcmp.lt.s32.totalorder %v1654, 10
          %v1656 = vsel %vm1655, 1, 0
          %vm1657 = vcmp.eq.s32.totalorder %v1656, 1
          %v1658 = vsel %vm1657, %v1631, -1e+30
          %v1659 = vsel %vm1657, %v1634, -1e+30
          %v1660 = vsel %vm1657, %v1639, -1e+30
          %v1661 = vsel %vm1657, %v1642, -1e+30
          %v1662 = vsel %vm1657, %v1647, -1e+30
          %v1663 = vsel %vm1657, %v1650, -1e+30
          %1664 = vmax.xlane.f32.xlu0 %v1658
          %v1665 = vpop.xlane.xlu0 %1664
          %1666 = vmax.xlane.f32.xlu0 %v1659
          %v1667 = vpop.xlane.xlu0 %1666
          %1668 = vmax.xlane.f32.xlu0 %v1660
          %v1669 = vpop.xlane.xlu0 %1668
          %1670 = vmax.xlane.f32.xlu0 %v1661
          %v1671 = vpop.xlane.xlu0 %1670
          %1672 = vmax.xlane.f32.xlu0 %v1662
          %v1673 = vpop.xlane.xlu0 %1672
          %1674 = vmax.xlane.f32.xlu0 %v1663
          %v1675 = vpop.xlane.xlu0 %1674
          %v1676 = vsub.f32 %v1658, %v1665
          %v1677 = vsub.f32 %v1659, %v1667
          %v1678 = vsub.f32 %v1660, %v1669
          %v1679 = vsub.f32 %v1661, %v1671
          %v1680 = vsub.f32 %v1662, %v1673
          %v1681 = vsub.f32 %v1663, %v1675
          %v1682 = vmul.f32 %v1676, 1.442695
          %v1683 = vpow.pop %v1682
          %v1684 = vmul.f32 %v1677, 1.442695
          %v1685 = vpow.pop %v1684
          %v1686 = vmul.f32 %v1678, 1.442695
          %v1687 = vpow.pop %v1686
          %v1688 = vmul.f32 %v1679, 1.442695
          %v1689 = vpow.pop %v1688
          %v1690 = vmul.f32 %v1680, 1.442695
          %v1691 = vpow.pop %v1690
          %v1692 = vmul.f32 %v1681, 1.442695
          %v1693 = vpow.pop %v1692
          %1694 = vadd.xlane.f32.xlu0 %v1683
          %v1695 = vpop.xlane.xlu0 %1694
          %1696 = vadd.xlane.f32.xlu0 %v1685
          %v1697 = vpop.xlane.xlu0 %1696
          %1698 = vadd.xlane.f32.xlu0 %v1687
          %v1699 = vpop.xlane.xlu0 %1698
          %1700 = vadd.xlane.f32.xlu0 %v1689
          %v1701 = vpop.xlane.xlu0 %1700
          %1702 = vadd.xlane.f32.xlu0 %v1691
          %v1703 = vpop.xlane.xlu0 %1702
          %1704 = vadd.xlane.f32.xlu0 %v1693
          %v1705 = vpop.xlane.xlu0 %1704
          %v1706 = vlog2.pop %v1695
          %v1707 = vmul.f32 %v1706, 0.6931472
          %v1708 = vlog2.pop %v1697
          %v1709 = vmul.f32 %v1708, 0.6931472
          %v1710 = vlog2.pop %v1699
          %v1711 = vmul.f32 %v1710, 0.6931472
          %v1712 = vlog2.pop %v1701
          %v1713 = vmul.f32 %v1712, 0.6931472
          %v1714 = vlog2.pop %v1703
          %v1715 = vmul.f32 %v1714, 0.6931472
          %v1716 = vlog2.pop %v1705
          %v1717 = vmul.f32 %v1716, 0.6931472
          %v1718 = vsub.f32 %v1676, %v1707
          %v1719 = vsub.f32 %v1677, %v1709
          %v1720 = vsub.f32 %v1678, %v1711
          %v1721 = vsub.f32 %v1679, %v1713
          %v1722 = vsub.f32 %v1680, %v1715
          %v1723 = vsub.f32 %v1681, %v1717
          %1724 = vst [vmem:[%s316] sm:$0xff] %v1718
          %1725 = vst [vmem:[%s316 + $0x8] sm:$0xff] %v1719
          %1726 = vst [vmem:[%s316 + $0x10] sm:$0xff] %v1720
          %1727 = vst [vmem:[%s316 + $0x18] sm:$0xff] %v1721
          %1728 = vst [vmem:[%s316 + $0x20] sm:$0xff] %v1722
          %1729 = vst [vmem:[%s316 + $0x28] sm:$0xff] %v1723
        $region72: #{tpu_custom_call.1} parent=39 // pred_fallthru
          _
        %s1730 = sand.u32 %s162, 1
        %s1731 = scalar_lea.sflag [#allocation6], %s1730
        %s1732 = sand.u32 %s162, 1
        %s1733 = smul.addr %s1732, 48
        %s1734 = scalar_lea.vmem [#allocation12], %s1733
        // Predicated region
        $region73: #{tpu_custom_call.1} parent=39 // pred_check
          %p1735 = pneg %p172
        $region74: #{tpu_custom_call.1} parent=39 // pred_check_branch
          %1737 = sbr.rel (%p1735) target = $region76
        $region75: #{tpu_custom_call.1} parent=39 // pred_region
          %p1738 = scmp.eq.s32.totalorder %s28, 2
          %s1739 = scalar_select %p1738, %s29, 0
          %s1740 = smul.u32 6, %s1739
          %s1741 = ssub.s32 13, %s1740
          %p1742 = scmp.lt.s32.totalorder %s1741, 6
          %s1743 = scalar_select %p1742, %s1741, 6
          %s1744 = smul.u32 128, %s1743
          %s1746 = ssub.s32 768, %s1744
          %1747 = vsyncadd %s1731, %s1746
          %p1748 = scmp.ne.s32.totalorder 0, %s1744
          %s1749 = smul.addr %s1740, 128
          %s1750 = scalar_lea.hbm %s5, %s1749
          %s1751 = smul.u32 8, %s1743
          %s1752 = sshll.u32 %s1734, 4
          %s1753 = int_to_ptr.vmem [resolvable:$true] %s1752
          %s1754 = sshll.u32 %s1751, 4
          %1758 = dma.vmem_to_hbm [thread:$0]  (%p1748), %s1753, %s1754, %s1750, %s1731, 128, 128, 8
        $region76: #{tpu_custom_call.1} parent=39 // pred_fallthru
          _
      $region40: #{tpu_custom_call.1} parent=5 // pred_fallthru
        _
      %p1759 = scmp.le.s32.totalorder 2, %s19
      // Predicated region
      $region77: #{tpu_custom_call.1} parent=5 // pred_check
        %p1760 = pneg %p1759
      $region78: #{tpu_custom_call.1} parent=5 // pred_check_branch
        %1762 = sbr.rel (%p1760) target = $region80
      $region79: #{tpu_custom_call.1} parent=5 // pred_region
        %s1763 = ssub.s32 %s19, 2
        // Predicated region
        $region81: #{tpu_custom_call.1} parent=79 // pred_check
          %p1764 = pneg %p178
        $region82: #{tpu_custom_call.1} parent=79 // pred_check_branch
          %1766 = sbr.rel (%p1764) target = $region84
        $region83: #{tpu_custom_call.1} parent=79 // pred_region
          %s1767 = sand.u32 %s163, 1
          %s1768 = scalar_lea.sflag [#allocation6], %s1767
          %s1769 = sand.u32 %s163, 1
          %s1770 = smul.addr %s1769, 48
          %s1771 = scalar_lea.vmem [#allocation12], %s1770
          %1772 = dma.done %s1768, 768
        $region84: #{tpu_custom_call.1} parent=79 // pred_fallthru
          _
      $region80: #{tpu_custom_call.1} parent=5 // pred_fallthru
        _
    $region6: #{tpu_custom_call.1} parent=1 // loop_footer
      %s23 = sadd.s32 1, %s19
    $region7: #{tpu_custom_call.1} parent=1 // loop_footer_branch
      %18 = sbr.rel target = $region3
    $region8: #{tpu_custom_call.1} parent=1 // loop_exit
      _
    %1773 = vsyncpa [#allocation5], 1
    %s1774 = scalar_lea.sflag [#allocation5], 1
    %1775 = vsyncpa %s1774, 1
    %1776 = vsyncpa [#allocation8], 1
    %1777 = vsyncpa [#allocation11], 1
    %1778 = vsyncpa [#allocation6], 1
    %s1779 = scalar_lea.sflag [#allocation6], 1
    %1780 = vsyncpa %s1779, 1

</llo_original>
